<compile_context>
chip_gen: v5e
topology: v5e:2x2
jax: 0.10.0
libtpu: 0.0.40
codegen_flags: <defaults>
</compile_context>

<pallas_src>
import math
import functools

import jax
import jax.numpy as jnp
from jax.experimental import pallas as pl
from jax.experimental.pallas import tpu as pltpu


def _layer_norm(x, gamma, beta, eps=1e-5):
    # PyTorch nn.LayerNorm: biased variance, eps inside sqrt.
    mu = jnp.mean(x, axis=-1, keepdims=True)
    var = jnp.mean((x - mu) ** 2, axis=-1, keepdims=True)
    return (x - mu) * jax.lax.rsqrt(var + eps) * gamma + beta


def spatial_encoder_kernel(x_ref, pos_ref,
                           wqkv_ref, bqkv_ref,
                           wo_ref, bo_ref,
                           g1_ref, be1_ref,
                           w1_ref, b1_ref,
                           w2_ref, b2_ref,
                           g2_ref, be2_ref,
                           o_ref, *, heads, seq, bt, mm_dtype, approx_softmax):
    R, D = x_ref.shape                       # R = bt * seq rows in this block
    hd = D // heads
    scale = 1.0 / math.sqrt(hd)
    bh = heads * bt

    def mm(a, b):
        # Weights arrive already in mm_dtype from the wrapper; f32 accumulate.
        return jnp.dot(a.astype(mm_dtype), b, preferred_element_type=jnp.float32)

    # Positional encodings (dropout = 0 -> identity). pos is a single (S, D)
    # table, broadcast over the bt batch elements of this block in-kernel.
    x = x_ref[...] + jnp.tile(pos_ref[...], (bt, 1))                 # (R, D)

    # ---- fused QKV projection: one full-width MXU matmul (R, D) @ (D, 3D) ----
    qkv = mm(x, wqkv_ref[...]) + bqkv_ref[...]                       # (R, 3D)

    # Head split = pure lane-slice relayout (no per-head matmuls).
    # Resulting batch index is h * bt + b, consistent for q/k/v and ctx.
    def heads_of(base):
        return jnp.stack(
            [qkv[:, base + h * hd: base + (h + 1) * hd] for h in range(heads)],
            axis=0).reshape(bh, seq, hd)                             # (H*bt, S, hd)

    q = heads_of(0) * scale
    k = heads_of(D)
    v = heads_of(2 * D)

    # ---- batched attention (single leading batch dim, flash-style form) ----
    s = jnp.einsum('bqd,bkd->bqk', q, k,
                   preferred_element_type=jnp.float32)               # (H*bt, S, S)
    s = s - jnp.max(s, axis=-1, keepdims=True)
    p = jnp.exp(s)
    denom = jnp.sum(p, axis=-1, keepdims=True)
    if approx_softmax:
        p = p * pl.reciprocal(denom, approx=True)   # EUP slot; tiny rel. error
    else:
        p = p / denom                               # exact (PyTorch parity)
    ctx = jnp.einsum('bqk,bkd->bqd', p.astype(v.dtype), v,
                     preferred_element_type=jnp.float32)             # (H*bt, S, hd)

    # ---- concat heads back to (R, D), then one (R, D) @ (D, D) out-proj ----
    ctx = ctx.reshape(heads, R, hd)
    attn_cat = jnp.concatenate([ctx[h] for h in range(heads)], axis=-1)  # (R, D)
    attn = mm(attn_cat, wo_ref[...]) + bo_ref[...]

    # ---- residual + LayerNorm 1 (post-norm) ----
    x1 = _layer_norm(x + attn, g1_ref[...], be1_ref[...])

    # ---- feed-forward: Linear -> ReLU -> Linear (weights pre-transposed) ----
    h1 = jnp.maximum(mm(x1, w1_ref[...]) + b1_ref[...], 0.0)
    h2 = mm(h1, w2_ref[...]) + b2_ref[...]

    # ---- residual + LayerNorm 2 ----
    # Note: at D=32 output stores are masked (32/128 lanes); a lane-dense
    # repack of the I/O slab would help if B*S grows large in production.
    o_ref[...] = _layer_norm(x1 + h2, g2_ref[...], be2_ref[...]).astype(o_ref.dtype)


def _block_vmem_bytes(bt, seq, d_model, heads):
    """Rough f32 VMEM footprint of one grid step (incl. double-buffered I/O)."""
    r = bt * seq
    io = 2 * 2 * r * d_model * 4                       # x + out, double-buffered
    inter = r * (18 * d_model + 2 * heads * seq) * 4   # live intermediates bound
    return io + inter


def _pick_block_batch(B, S, D, heads, vmem_budget, param_bytes):
    """Batch elements per grid step.

    * Largest Bt whose block fits the VMEM budget -> fewest grid steps
      (single-TC v5e/v6e want grid=(1,) whenever it fits; ~600 cyc/step
      overhead otherwise buys nothing).
    * Only split into >=2 steps (v7x megacore) when each step still carries
      >= 512 rows of work, so the split is never pure overhead.
    * Bt*S must be sublane-aligned (multiple of 8) unless it is the full
      first dim.
    """
    avail = max(vmem_budget - 2 * param_bytes - (4 << 20), 1 << 20)
    legal = [c for c in range(1, B + 1)
             if B % c == 0 and ((c * S) % 8 == 0 or c == B)]
    fitting = [c for c in legal if _block_vmem_bytes(c, S, D, heads) <= avail]
    if not fitting:
        fitting = [legal[0]]            # smallest legal block; best we can do
    bt = fitting[-1]
    if bt == B and B >= 2:
        split = [c for c in fitting if c < B and c * S >= 512]
        if split:
            bt = split[-1]              # 2 fat steps -> both v7x TCs get work
    return bt


def spatial_encoder(x, params, *, heads, approx_softmax=False):
    B, S, D = x.shape
    assert D % heads == 0, "embed dim must be divisible by heads"
    assert D % 2 == 0, "sinusoidal positional table requires even d_model"

    # ---- generation-aware VMEM budget (128 MiB v5e/v6e, 64 MiB v7x) ----
    try:
        vmem_cap = int(pltpu.get_tpu_info().vmem_capacity_bytes)
    except Exception:
        vmem_cap = 64 << 20             # conservative: v7x per-core capacity
    vmem_budget = int(vmem_cap * 0.85)  # headroom for compiler scratch

    # bf16 MXU operands (f32 accumulation) once the matmuls are big enough to
    # be MXU-bound (v6e/v7x); f32 at the tiny test shape for exact fidelity.
    use_bf16 = (D >= 256) or (B * S >= 4096 and D >= 128)
    mm_dtype = jnp.bfloat16 if use_bf16 else jnp.float32

    # ---- parameter prep (wrapper-side / XLA, one-time, free vs. the kernel) ----
    pos = (params["pe"] + params["lpos"]).astype(jnp.float32)        # (S, D)

    w_in = params["w_in"]               # (3D, D) PyTorch in_proj layout
    wqkv = w_in.T.astype(mm_dtype)      # (D, 3D) = [Wq^T | Wk^T | Wv^T]
    bqkv = params["b_in"].reshape(1, 3 * D).astype(jnp.float32)

    wo_t = params["w_out"].T.astype(mm_dtype)                        # (D, D)
    bo = params["b_out"].reshape(1, D).astype(jnp.float32)

    w1t = params["w1"].T.astype(mm_dtype)                            # (D, 4D)
    b1 = params["b1"].reshape(1, 4 * D).astype(jnp.float32)
    w2t = params["w2"].T.astype(mm_dtype)                            # (4D, D)
    b2 = params["b2"].reshape(1, D).astype(jnp.float32)
    g1 = params["g1"].reshape(1, D).astype(jnp.float32)
    be1 = params["be1"].reshape(1, D).astype(jnp.float32)
    g2 = params["g2"].reshape(1, D).astype(jnp.float32)
    be2 = params["be2"].reshape(1, D).astype(jnp.float32)

    consts = [pos, wqkv, bqkv, wo_t, bo, g1, be1, w1t, b1, w2t, b2, g2, be2]
    param_bytes = sum(int(a.size) * a.dtype.itemsize for a in consts)

    Bt = _pick_block_batch(B, S, D, heads, vmem_budget, param_bytes)
    R = Bt * S
    num_steps = B // Bt

    # Grid-invariant constants: single-buffer them once their footprint is
    # non-trivial (v7x's tight 64 MiB); keep the default path at tiny sizes.
    single_buffer_consts = param_bytes > (8 << 20)

    def _const_spec(a):
        kwargs = {}
        if single_buffer_consts:
            kwargs["pipeline_mode"] = pl.Buffered(1)
        return pl.BlockSpec(a.shape, lambda i, _n=a.ndim: (0,) * _n, **kwargs)

    in_specs = [pl.BlockSpec((R, D), lambda i: (i, 0))] + [_const_spec(a) for a in consts]
    out_specs = pl.BlockSpec((R, D), lambda i: (i, 0))

    # Scoped-VMEM limit from the real footprint, capped by capacity-with-headroom.
    const_factor = 1 if single_buffer_consts else 2
    est = const_factor * param_bytes + _block_vmem_bytes(Bt, S, D, heads) + (4 << 20)
    vmem_limit = int(min(max(est, 32 << 20), vmem_budget))

    kernel = functools.partial(spatial_encoder_kernel, heads=heads, seq=S, bt=Bt,
                               mm_dtype=mm_dtype, approx_softmax=approx_softmax)
    out2d = pl.pallas_call(
        kernel,
        out_shape=jax.ShapeDtypeStruct((B * S, D), jnp.float32),
        grid=(num_steps,),
        in_specs=in_specs,
        out_specs=out_specs,
        compiler_params=pltpu.CompilerParams(
            dimension_semantics=("parallel",),
            vmem_limit_bytes=vmem_limit),
    )(x.reshape(B * S, D).astype(jnp.float32), *consts)
    return out2d.reshape(B, S, D)


def make_params(key, seq, d_model):
    """Deterministic synthetic parameters matching the PyTorch module shapes."""
    ks = jax.random.split(key, 10)

    # Sinusoidal positional encoding table (PositionalEncoding), sliced to seq.
    position = jnp.arange(seq, dtype=jnp.float32)[:, None]
    div_term = jnp.exp(jnp.arange(0, d_model, 2, dtype=jnp.float32)
                       * (-math.log(10000.0) / d_model))
    pe = jnp.zeros((seq, d_model), jnp.float32)
    pe = pe.at[:, 0::2].set(jnp.sin(position * div_term))
    pe = pe.at[:, 1::2].set(jnp.cos(position * div_term))

    # Learned positional embedding (nn.Embedding init ~ N(0, 1)), sliced to seq.
    lpos = jax.random.normal(ks[0], (seq, d_model), jnp.float32)

    s = 0.02
    params = {
        "pe": pe,
        "lpos": lpos,
        # MultiheadAttention (PyTorch layouts: out_features x in_features)
        "w_in": s * jax.random.normal(ks[1], (3 * d_model, d_model), jnp.float32),
        "b_in": s * jax.random.normal(ks[2], (3 * d_model,), jnp.float32),
        "w_out": s * jax.random.normal(ks[3], (d_model, d_model), jnp.float32),
        "b_out": s * jax.random.normal(ks[4], (d_model,), jnp.float32),
        # LayerNorm 1
        "g1": jnp.ones((d_model,), jnp.float32),
        "be1": jnp.zeros((d_model,), jnp.float32),
        # Feed-forward (dim_feedforward = 4 * d_model)
        "w1": s * jax.random.normal(ks[5], (4 * d_model, d_model), jnp.float32),
        "b1": s * jax.random.normal(ks[6], (4 * d_model,), jnp.float32),
        "w2": s * jax.random.normal(ks[7], (d_model, 4 * d_model), jnp.float32),
        "b2": s * jax.random.normal(ks[8], (d_model,), jnp.float32),
        # LayerNorm 2
        "g2": jnp.ones((d_model,), jnp.float32),
        "be2": jnp.zeros((d_model,), jnp.float32),
    }
    return params


if __name__ == "__main__":
    B, S, D, HEADS = 2, 8, 32, 8   # in_dim=32, heads=8 -> head_dim=4, layers=1

    key = jax.random.PRNGKey(0)
    kx, kp = jax.random.split(key)
    x = jax.random.normal(kx, (B, S, D), jnp.float32)
    params = make_params(kp, S, D)

    out = spatial_encoder(x, params, heads=HEADS)
    jax.block_until_ready(out)
    assert out.shape == (B, S, D)
    assert bool(jnp.all(jnp.isfinite(out)))
    print("KERNEL_OK")
</pallas_src>

<mosaic_0001>
module attributes {stable_mosaic.version = 11 : i64} {
  func.func @spatial_encoder_kernel(%arg0: i32, %arg1: memref<16x32xf32, #tpu.memory_space<vmem>>, %arg2: memref<8x32xf32, #tpu.memory_space<vmem>>, %arg3: memref<32x96xf32, #tpu.memory_space<vmem>>, %arg4: memref<1x96xf32, #tpu.memory_space<vmem>>, %arg5: memref<32x32xf32, #tpu.memory_space<vmem>>, %arg6: memref<1x32xf32, #tpu.memory_space<vmem>>, %arg7: memref<1x32xf32, #tpu.memory_space<vmem>>, %arg8: memref<1x32xf32, #tpu.memory_space<vmem>>, %arg9: memref<32x128xf32, #tpu.memory_space<vmem>>, %arg10: memref<1x128xf32, #tpu.memory_space<vmem>>, %arg11: memref<128x32xf32, #tpu.memory_space<vmem>>, %arg12: memref<1x32xf32, #tpu.memory_space<vmem>>, %arg13: memref<1x32xf32, #tpu.memory_space<vmem>>, %arg14: memref<1x32xf32, #tpu.memory_space<vmem>>, %arg15: memref<16x32xf32, #tpu.memory_space<vmem>>) attributes {dimension_semantics = [#tpu.dimension_semantics<parallel>], iteration_bounds = array<i64: 1>, scalar_prefetch = 0 : i64, scratch_operands = 0 : i64, tpu.core_type = #tpu.core_type<tc>, window_params = [{transform_indices = @transform_0, window_bounds = array<i64: 16, 32>}, {pipeline_mode = #tpu.pipeline_mode<synchronous>, transform_indices = @transform_1, window_bounds = array<i64: 8, 32>}, {pipeline_mode = #tpu.pipeline_mode<synchronous>, transform_indices = @transform_2, window_bounds = array<i64: 32, 96>}, {pipeline_mode = #tpu.pipeline_mode<synchronous>, transform_indices = @transform_3, window_bounds = array<i64: 1, 96>}, {pipeline_mode = #tpu.pipeline_mode<synchronous>, transform_indices = @transform_4, window_bounds = array<i64: 32, 32>}, {pipeline_mode = #tpu.pipeline_mode<synchronous>, transform_indices = @transform_5, window_bounds = array<i64: 1, 32>}, {pipeline_mode = #tpu.pipeline_mode<synchronous>, transform_indices = @transform_6, window_bounds = array<i64: 1, 32>}, {pipeline_mode = #tpu.pipeline_mode<synchronous>, transform_indices = @transform_7, window_bounds = array<i64: 1, 32>}, {pipeline_mode = #tpu.pipeline_mode<synchronous>, transform_indices = @transform_8, window_bounds = array<i64: 32, 128>}, {pipeline_mode = #tpu.pipeline_mode<synchronous>, transform_indices = @transform_9, window_bounds = array<i64: 1, 128>}, {pipeline_mode = #tpu.pipeline_mode<synchronous>, transform_indices = @transform_10, window_bounds = array<i64: 128, 32>}, {pipeline_mode = #tpu.pipeline_mode<synchronous>, transform_indices = @transform_11, window_bounds = array<i64: 1, 32>}, {pipeline_mode = #tpu.pipeline_mode<synchronous>, transform_indices = @transform_12, window_bounds = array<i64: 1, 32>}, {pipeline_mode = #tpu.pipeline_mode<synchronous>, transform_indices = @transform_13, window_bounds = array<i64: 1, 32>}, {transform_indices = @transform_14, window_bounds = array<i64: 16, 32>}]} {
    %c0 = arith.constant 0 : index
    %c0_0 = arith.constant 0 : index
    %0 = vector.load %arg1[%c0, %c0_0] : memref<16x32xf32, #tpu.memory_space<vmem>>, vector<16x32xf32>
    %c0_1 = arith.constant 0 : index
    %c0_2 = arith.constant 0 : index
    %1 = vector.load %arg2[%c0_1, %c0_2] : memref<8x32xf32, #tpu.memory_space<vmem>>, vector<8x32xf32>
    %2 = tpu.concatenate %1, %1 in 0 : vector<8x32xf32>, vector<8x32xf32> -> vector<16x32xf32>
    %3 = arith.addf %0, %2 : vector<16x32xf32>
    %c0_3 = arith.constant 0 : index
    %c0_4 = arith.constant 0 : index
    %4 = vector.load %arg3[%c0_3, %c0_4] : memref<32x96xf32, #tpu.memory_space<vmem>>, vector<32x96xf32>
    %cst = arith.constant dense<0.000000e+00> : vector<16x96xf32>
    %5 = tpu.matmul %3, %4, %cst {dimension_numbers = #tpu.dot_dimension_numbers<[1], [0], [0], [1], [0, 0, 1, 1], [], []>} : vector<16x32xf32>, vector<32x96xf32>, vector<16x96xf32> -> vector<16x96xf32>
    %c0_5 = arith.constant 0 : index
    %c0_6 = arith.constant 0 : index
    %6 = vector.load %arg4[%c0_5, %c0_6] : memref<1x96xf32, #tpu.memory_space<vmem>>, vector<1x96xf32>
    %7 = vector.broadcast %6 : vector<1x96xf32> to vector<16x96xf32>
    %8 = arith.addf %5, %7 : vector<16x96xf32>
    %9 = vector.extract_strided_slice %8 {offsets = [0, 0], sizes = [16, 4], strides = [1, 1]} : vector<16x96xf32> to vector<16x4xf32>
    %10 = vector.extract_strided_slice %8 {offsets = [0, 4], sizes = [16, 4], strides = [1, 1]} : vector<16x96xf32> to vector<16x4xf32>
    %11 = vector.extract_strided_slice %8 {offsets = [0, 8], sizes = [16, 4], strides = [1, 1]} : vector<16x96xf32> to vector<16x4xf32>
    %12 = vector.extract_strided_slice %8 {offsets = [0, 12], sizes = [16, 4], strides = [1, 1]} : vector<16x96xf32> to vector<16x4xf32>
    %13 = vector.extract_strided_slice %8 {offsets = [0, 16], sizes = [16, 4], strides = [1, 1]} : vector<16x96xf32> to vector<16x4xf32>
    %14 = vector.extract_strided_slice %8 {offsets = [0, 20], sizes = [16, 4], strides = [1, 1]} : vector<16x96xf32> to vector<16x4xf32>
    %15 = vector.extract_strided_slice %8 {offsets = [0, 24], sizes = [16, 4], strides = [1, 1]} : vector<16x96xf32> to vector<16x4xf32>
    %16 = vector.extract_strided_slice %8 {offsets = [0, 28], sizes = [16, 4], strides = [1, 1]} : vector<16x96xf32> to vector<16x4xf32>
    %17 = vector.shape_cast %9 : vector<16x4xf32> to vector<1x16x4xf32>
    %18 = vector.shape_cast %10 : vector<16x4xf32> to vector<1x16x4xf32>
    %19 = vector.shape_cast %11 : vector<16x4xf32> to vector<1x16x4xf32>
    %20 = vector.shape_cast %12 : vector<16x4xf32> to vector<1x16x4xf32>
    %21 = vector.shape_cast %13 : vector<16x4xf32> to vector<1x16x4xf32>
    %22 = vector.shape_cast %14 : vector<16x4xf32> to vector<1x16x4xf32>
    %23 = vector.shape_cast %15 : vector<16x4xf32> to vector<1x16x4xf32>
    %24 = vector.shape_cast %16 : vector<16x4xf32> to vector<1x16x4xf32>
    %25 = tpu.concatenate %17, %18, %19, %20, %21, %22, %23, %24 in 0 : vector<1x16x4xf32>, vector<1x16x4xf32>, vector<1x16x4xf32>, vector<1x16x4xf32>, vector<1x16x4xf32>, vector<1x16x4xf32>, vector<1x16x4xf32>, vector<1x16x4xf32> -> vector<8x16x4xf32>
    %26 = vector.shape_cast %25 : vector<8x16x4xf32> to vector<16x8x4xf32>
    %cst_7 = arith.constant 5.000000e-01 : f32
    %27 = vector.broadcast %cst_7 : f32 to vector<16x8x4xf32>
    %28 = arith.mulf %26, %27 : vector<16x8x4xf32>
    %29 = vector.extract_strided_slice %8 {offsets = [0, 32], sizes = [16, 4], strides = [1, 1]} : vector<16x96xf32> to vector<16x4xf32>
    %30 = vector.extract_strided_slice %8 {offsets = [0, 36], sizes = [16, 4], strides = [1, 1]} : vector<16x96xf32> to vector<16x4xf32>
    %31 = vector.extract_strided_slice %8 {offsets = [0, 40], sizes = [16, 4], strides = [1, 1]} : vector<16x96xf32> to vector<16x4xf32>
    %32 = vector.extract_strided_slice %8 {offsets = [0, 44], sizes = [16, 4], strides = [1, 1]} : vector<16x96xf32> to vector<16x4xf32>
    %33 = vector.extract_strided_slice %8 {offsets = [0, 48], sizes = [16, 4], strides = [1, 1]} : vector<16x96xf32> to vector<16x4xf32>
    %34 = vector.extract_strided_slice %8 {offsets = [0, 52], sizes = [16, 4], strides = [1, 1]} : vector<16x96xf32> to vector<16x4xf32>
    %35 = vector.extract_strided_slice %8 {offsets = [0, 56], sizes = [16, 4], strides = [1, 1]} : vector<16x96xf32> to vector<16x4xf32>
    %36 = vector.extract_strided_slice %8 {offsets = [0, 60], sizes = [16, 4], strides = [1, 1]} : vector<16x96xf32> to vector<16x4xf32>
    %37 = vector.shape_cast %29 : vector<16x4xf32> to vector<1x16x4xf32>
    %38 = vector.shape_cast %30 : vector<16x4xf32> to vector<1x16x4xf32>
    %39 = vector.shape_cast %31 : vector<16x4xf32> to vector<1x16x4xf32>
    %40 = vector.shape_cast %32 : vector<16x4xf32> to vector<1x16x4xf32>
    %41 = vector.shape_cast %33 : vector<16x4xf32> to vector<1x16x4xf32>
    %42 = vector.shape_cast %34 : vector<16x4xf32> to vector<1x16x4xf32>
    %43 = vector.shape_cast %35 : vector<16x4xf32> to vector<1x16x4xf32>
    %44 = vector.shape_cast %36 : vector<16x4xf32> to vector<1x16x4xf32>
    %45 = tpu.concatenate %37, %38, %39, %40, %41, %42, %43, %44 in 0 : vector<1x16x4xf32>, vector<1x16x4xf32>, vector<1x16x4xf32>, vector<1x16x4xf32>, vector<1x16x4xf32>, vector<1x16x4xf32>, vector<1x16x4xf32>, vector<1x16x4xf32> -> vector<8x16x4xf32>
    %46 = vector.shape_cast %45 : vector<8x16x4xf32> to vector<16x8x4xf32>
    %47 = vector.extract_strided_slice %8 {offsets = [0, 64], sizes = [16, 4], strides = [1, 1]} : vector<16x96xf32> to vector<16x4xf32>
    %48 = vector.extract_strided_slice %8 {offsets = [0, 68], sizes = [16, 4], strides = [1, 1]} : vector<16x96xf32> to vector<16x4xf32>
    %49 = vector.extract_strided_slice %8 {offsets = [0, 72], sizes = [16, 4], strides = [1, 1]} : vector<16x96xf32> to vector<16x4xf32>
    %50 = vector.extract_strided_slice %8 {offsets = [0, 76], sizes = [16, 4], strides = [1, 1]} : vector<16x96xf32> to vector<16x4xf32>
    %51 = vector.extract_strided_slice %8 {offsets = [0, 80], sizes = [16, 4], strides = [1, 1]} : vector<16x96xf32> to vector<16x4xf32>
    %52 = vector.extract_strided_slice %8 {offsets = [0, 84], sizes = [16, 4], strides = [1, 1]} : vector<16x96xf32> to vector<16x4xf32>
    %53 = vector.extract_strided_slice %8 {offsets = [0, 88], sizes = [16, 4], strides = [1, 1]} : vector<16x96xf32> to vector<16x4xf32>
    %54 = vector.extract_strided_slice %8 {offsets = [0, 92], sizes = [16, 4], strides = [1, 1]} : vector<16x96xf32> to vector<16x4xf32>
    %55 = vector.shape_cast %47 : vector<16x4xf32> to vector<1x16x4xf32>
    %56 = vector.shape_cast %48 : vector<16x4xf32> to vector<1x16x4xf32>
    %57 = vector.shape_cast %49 : vector<16x4xf32> to vector<1x16x4xf32>
    %58 = vector.shape_cast %50 : vector<16x4xf32> to vector<1x16x4xf32>
    %59 = vector.shape_cast %51 : vector<16x4xf32> to vector<1x16x4xf32>
    %60 = vector.shape_cast %52 : vector<16x4xf32> to vector<1x16x4xf32>
    %61 = vector.shape_cast %53 : vector<16x4xf32> to vector<1x16x4xf32>
    %62 = vector.shape_cast %54 : vector<16x4xf32> to vector<1x16x4xf32>
    %63 = tpu.concatenate %55, %56, %57, %58, %59, %60, %61, %62 in 0 : vector<1x16x4xf32>, vector<1x16x4xf32>, vector<1x16x4xf32>, vector<1x16x4xf32>, vector<1x16x4xf32>, vector<1x16x4xf32>, vector<1x16x4xf32>, vector<1x16x4xf32> -> vector<8x16x4xf32>
    %64 = vector.shape_cast %63 : vector<8x16x4xf32> to vector<16x8x4xf32>
    "tpu.trace_start"() <{level = 10 : i32, message = "bqd,bkd->bqk"}> : () -> ()
    %cst_8 = arith.constant dense<0.000000e+00> : vector<16x8x8xf32>
    %65 = tpu.matmul %28, %46, %cst_8 {dimension_numbers = #tpu.dot_dimension_numbers<[2], [2], [1], [1], [0, 0, 0, 1, 1, 1], [0], [0]>} : vector<16x8x4xf32>, vector<16x8x4xf32>, vector<16x8x8xf32> -> vector<16x8x8xf32>
    "tpu.trace_stop"() : () -> ()
    %cst_9 = arith.constant dense<0xFF800000> : vector<16x8xf32>
    %66 = vector.multi_reduction <maximumf>, %65, %cst_9 [2] : vector<16x8x8xf32> to vector<16x8xf32>
    %67 = vector.shape_cast %66 : vector<16x8xf32> to vector<16x8x1xf32>
    %68 = vector.broadcast %67 : vector<16x8x1xf32> to vector<16x8x8xf32>
    %69 = arith.subf %65, %68 : vector<16x8x8xf32>
    %70 = math.exp %69 : vector<16x8x8xf32>
    %cst_10 = arith.constant dense<0.000000e+00> : vector<16x8xf32>
    %71 = vector.multi_reduction <add>, %70, %cst_10 [2] : vector<16x8x8xf32> to vector<16x8xf32>
    %72 = vector.shape_cast %71 : vector<16x8xf32> to vector<16x8x1xf32>
    %73 = vector.broadcast %72 : vector<16x8x1xf32> to vector<16x8x8xf32>
    %74 = arith.divf %70, %73 : vector<16x8x8xf32>
    "tpu.trace_start"() <{level = 10 : i32, message = "bqk,bkd->bqd"}> : () -> ()
    %cst_11 = arith.constant dense<0.000000e+00> : vector<16x8x4xf32>
    %75 = tpu.matmul %74, %64, %cst_11 {dimension_numbers = #tpu.dot_dimension_numbers<[2], [1], [1], [2], [0, 0, 0, 1, 1, 2], [0], [0]>} : vector<16x8x8xf32>, vector<16x8x4xf32>, vector<16x8x4xf32> -> vector<16x8x4xf32>
    "tpu.trace_stop"() : () -> ()
    %76 = vector.shape_cast %75 : vector<16x8x4xf32> to vector<8x16x4xf32>
    %77 = vector.extract_strided_slice %76 {offsets = [0, 0, 0], sizes = [1, 16, 4], strides = [1, 1, 1]} : vector<8x16x4xf32> to vector<1x16x4xf32>
    %78 = vector.shape_cast %77 : vector<1x16x4xf32> to vector<16x4xf32>
    %79 = vector.extract_strided_slice %76 {offsets = [1, 0, 0], sizes = [1, 16, 4], strides = [1, 1, 1]} : vector<8x16x4xf32> to vector<1x16x4xf32>
    %80 = vector.shape_cast %79 : vector<1x16x4xf32> to vector<16x4xf32>
    %81 = vector.extract_strided_slice %76 {offsets = [2, 0, 0], sizes = [1, 16, 4], strides = [1, 1, 1]} : vector<8x16x4xf32> to vector<1x16x4xf32>
    %82 = vector.shape_cast %81 : vector<1x16x4xf32> to vector<16x4xf32>
    %83 = vector.extract_strided_slice %76 {offsets = [3, 0, 0], sizes = [1, 16, 4], strides = [1, 1, 1]} : vector<8x16x4xf32> to vector<1x16x4xf32>
    %84 = vector.shape_cast %83 : vector<1x16x4xf32> to vector<16x4xf32>
    %85 = vector.extract_strided_slice %76 {offsets = [4, 0, 0], sizes = [1, 16, 4], strides = [1, 1, 1]} : vector<8x16x4xf32> to vector<1x16x4xf32>
    %86 = vector.shape_cast %85 : vector<1x16x4xf32> to vector<16x4xf32>
    %87 = vector.extract_strided_slice %76 {offsets = [5, 0, 0], sizes = [1, 16, 4], strides = [1, 1, 1]} : vector<8x16x4xf32> to vector<1x16x4xf32>
    %88 = vector.shape_cast %87 : vector<1x16x4xf32> to vector<16x4xf32>
    %89 = vector.extract_strided_slice %76 {offsets = [6, 0, 0], sizes = [1, 16, 4], strides = [1, 1, 1]} : vector<8x16x4xf32> to vector<1x16x4xf32>
    %90 = vector.shape_cast %89 : vector<1x16x4xf32> to vector<16x4xf32>
    %91 = vector.extract_strided_slice %76 {offsets = [7, 0, 0], sizes = [1, 16, 4], strides = [1, 1, 1]} : vector<8x16x4xf32> to vector<1x16x4xf32>
    %92 = vector.shape_cast %91 : vector<1x16x4xf32> to vector<16x4xf32>
    %93 = tpu.concatenate %78, %80, %82, %84, %86, %88, %90, %92 in 1 : vector<16x4xf32>, vector<16x4xf32>, vector<16x4xf32>, vector<16x4xf32>, vector<16x4xf32>, vector<16x4xf32>, vector<16x4xf32>, vector<16x4xf32> -> vector<16x32xf32>
    %c0_12 = arith.constant 0 : index
    %c0_13 = arith.constant 0 : index
    %94 = vector.load %arg5[%c0_12, %c0_13] : memref<32x32xf32, #tpu.memory_space<vmem>>, vector<32x32xf32>
    %cst_14 = arith.constant dense<0.000000e+00> : vector<16x32xf32>
    %95 = tpu.matmul %93, %94, %cst_14 {dimension_numbers = #tpu.dot_dimension_numbers<[1], [0], [0], [1], [0, 0, 1, 1], [], []>} : vector<16x32xf32>, vector<32x32xf32>, vector<16x32xf32> -> vector<16x32xf32>
    %c0_15 = arith.constant 0 : index
    %c0_16 = arith.constant 0 : index
    %96 = vector.load %arg6[%c0_15, %c0_16] : memref<1x32xf32, #tpu.memory_space<vmem>>, vector<1x32xf32>
    %97 = vector.broadcast %96 : vector<1x32xf32> to vector<16x32xf32>
    %98 = arith.addf %95, %97 : vector<16x32xf32>
    %99 = arith.addf %3, %98 : vector<16x32xf32>
    %c0_17 = arith.constant 0 : index
    %c0_18 = arith.constant 0 : index
    %100 = vector.load %arg7[%c0_17, %c0_18] : memref<1x32xf32, #tpu.memory_space<vmem>>, vector<1x32xf32>
    %c0_19 = arith.constant 0 : index
    %c0_20 = arith.constant 0 : index
    %101 = vector.load %arg8[%c0_19, %c0_20] : memref<1x32xf32, #tpu.memory_space<vmem>>, vector<1x32xf32>
    %cst_21 = arith.constant dense<0.000000e+00> : vector<16xf32>
    %102 = vector.multi_reduction <add>, %99, %cst_21 [1] : vector<16x32xf32> to vector<16xf32>
    %103 = vector.shape_cast %102 : vector<16xf32> to vector<16x1xf32>
    %cst_22 = arith.constant 3.200000e+01 : f32
    %104 = vector.broadcast %cst_22 : f32 to vector<16x1xf32>
    %105 = arith.divf %103, %104 : vector<16x1xf32>
    %106 = vector.broadcast %105 : vector<16x1xf32> to vector<16x32xf32>
    %107 = arith.subf %99, %106 : vector<16x32xf32>
    %108 = arith.mulf %107, %107 : vector<16x32xf32>
    %cst_23 = arith.constant dense<0.000000e+00> : vector<16xf32>
    %109 = vector.multi_reduction <add>, %108, %cst_23 [1] : vector<16x32xf32> to vector<16xf32>
    %110 = vector.shape_cast %109 : vector<16xf32> to vector<16x1xf32>
    %cst_24 = arith.constant 3.200000e+01 : f32
    %111 = vector.broadcast %cst_24 : f32 to vector<16x1xf32>
    %112 = arith.divf %110, %111 : vector<16x1xf32>
    %113 = vector.broadcast %105 : vector<16x1xf32> to vector<16x32xf32>
    %114 = arith.subf %99, %113 : vector<16x32xf32>
    %cst_25 = arith.constant 9.99999974E-6 : f32
    %115 = vector.broadcast %cst_25 : f32 to vector<16x1xf32>
    %116 = arith.addf %112, %115 : vector<16x1xf32>
    %117 = math.rsqrt %116 : vector<16x1xf32>
    %118 = vector.broadcast %117 : vector<16x1xf32> to vector<16x32xf32>
    %119 = arith.mulf %114, %118 : vector<16x32xf32>
    %120 = vector.broadcast %100 : vector<1x32xf32> to vector<16x32xf32>
    %121 = arith.mulf %119, %120 : vector<16x32xf32>
    %122 = vector.broadcast %101 : vector<1x32xf32> to vector<16x32xf32>
    %123 = arith.addf %121, %122 : vector<16x32xf32>
    %c0_26 = arith.constant 0 : index
    %c0_27 = arith.constant 0 : index
    %124 = vector.load %arg9[%c0_26, %c0_27] : memref<32x128xf32, #tpu.memory_space<vmem>>, vector<32x128xf32>
    %cst_28 = arith.constant dense<0.000000e+00> : vector<16x128xf32>
    %125 = tpu.matmul %123, %124, %cst_28 {dimension_numbers = #tpu.dot_dimension_numbers<[1], [0], [0], [1], [0, 0, 1, 1], [], []>} : vector<16x32xf32>, vector<32x128xf32>, vector<16x128xf32> -> vector<16x128xf32>
    %c0_29 = arith.constant 0 : index
    %c0_30 = arith.constant 0 : index
    %126 = vector.load %arg10[%c0_29, %c0_30] : memref<1x128xf32, #tpu.memory_space<vmem>>, vector<1x128xf32>
    %127 = vector.broadcast %126 : vector<1x128xf32> to vector<16x128xf32>
    %128 = arith.addf %125, %127 : vector<16x128xf32>
    %cst_31 = arith.constant 0.000000e+00 : f32
    %129 = vector.broadcast %cst_31 : f32 to vector<16x128xf32>
    %130 = arith.maximumf %128, %129 : vector<16x128xf32>
    %c0_32 = arith.constant 0 : index
    %c0_33 = arith.constant 0 : index
    %131 = vector.load %arg11[%c0_32, %c0_33] : memref<128x32xf32, #tpu.memory_space<vmem>>, vector<128x32xf32>
    %cst_34 = arith.constant dense<0.000000e+00> : vector<16x32xf32>
    %132 = tpu.matmul %130, %131, %cst_34 {dimension_numbers = #tpu.dot_dimension_numbers<[1], [0], [0], [1], [0, 0, 1, 1], [], []>} : vector<16x128xf32>, vector<128x32xf32>, vector<16x32xf32> -> vector<16x32xf32>
    %c0_35 = arith.constant 0 : index
    %c0_36 = arith.constant 0 : index
    %133 = vector.load %arg12[%c0_35, %c0_36] : memref<1x32xf32, #tpu.memory_space<vmem>>, vector<1x32xf32>
    %134 = vector.broadcast %133 : vector<1x32xf32> to vector<16x32xf32>
    %135 = arith.addf %132, %134 : vector<16x32xf32>
    %136 = arith.addf %123, %135 : vector<16x32xf32>
    %c0_37 = arith.constant 0 : index
    %c0_38 = arith.constant 0 : index
    %137 = vector.load %arg13[%c0_37, %c0_38] : memref<1x32xf32, #tpu.memory_space<vmem>>, vector<1x32xf32>
    %c0_39 = arith.constant 0 : index
    %c0_40 = arith.constant 0 : index
    %138 = vector.load %arg14[%c0_39, %c0_40] : memref<1x32xf32, #tpu.memory_space<vmem>>, vector<1x32xf32>
    %cst_41 = arith.constant dense<0.000000e+00> : vector<16xf32>
    %139 = vector.multi_reduction <add>, %136, %cst_41 [1] : vector<16x32xf32> to vector<16xf32>
    %140 = vector.shape_cast %139 : vector<16xf32> to vector<16x1xf32>
    %cst_42 = arith.constant 3.200000e+01 : f32
    %141 = vector.broadcast %cst_42 : f32 to vector<16x1xf32>
    %142 = arith.divf %140, %141 : vector<16x1xf32>
    %143 = vector.broadcast %142 : vector<16x1xf32> to vector<16x32xf32>
    %144 = arith.subf %136, %143 : vector<16x32xf32>
    %145 = arith.mulf %144, %144 : vector<16x32xf32>
    %cst_43 = arith.constant dense<0.000000e+00> : vector<16xf32>
    %146 = vector.multi_reduction <add>, %145, %cst_43 [1] : vector<16x32xf32> to vector<16xf32>
    %147 = vector.shape_cast %146 : vector<16xf32> to vector<16x1xf32>
    %cst_44 = arith.constant 3.200000e+01 : f32
    %148 = vector.broadcast %cst_44 : f32 to vector<16x1xf32>
    %149 = arith.divf %147, %148 : vector<16x1xf32>
    %150 = vector.broadcast %142 : vector<16x1xf32> to vector<16x32xf32>
    %151 = arith.subf %136, %150 : vector<16x32xf32>
    %cst_45 = arith.constant 9.99999974E-6 : f32
    %152 = vector.broadcast %cst_45 : f32 to vector<16x1xf32>
    %153 = arith.addf %149, %152 : vector<16x1xf32>
    %154 = math.rsqrt %153 : vector<16x1xf32>
    %155 = vector.broadcast %154 : vector<16x1xf32> to vector<16x32xf32>
    %156 = arith.mulf %151, %155 : vector<16x32xf32>
    %157 = vector.broadcast %137 : vector<1x32xf32> to vector<16x32xf32>
    %158 = arith.mulf %156, %157 : vector<16x32xf32>
    %159 = vector.broadcast %138 : vector<1x32xf32> to vector<16x32xf32>
    %160 = arith.addf %158, %159 : vector<16x32xf32>
    %c0_46 = arith.constant 0 : index
    %c0_47 = arith.constant 0 : index
    %161 = vector.load %arg15[%c0_46, %c0_47] : memref<16x32xf32, #tpu.memory_space<vmem>>, vector<16x32xf32>
    tpu.vector_store %arg15[%c0_46, %c0_47], %160 {strides = array<i32>} : memref<16x32xf32, #tpu.memory_space<vmem>>, vector<16x32xf32>,
    return
  }
  func.func @transform_0(%arg0: i32) -> (i32, i32) {
    %c0_i32 = arith.constant 0 : i32
    %c0_i32_0 = arith.constant 0 : i32
    return %arg0, %c0_i32 : i32, i32
  }
  func.func @transform_1(%arg0: i32) -> (i32, i32) {
    %c0_i32 = arith.constant 0 : i32
    %c0_i32_0 = arith.constant 0 : i32
    %c0_i32_1 = arith.constant 0 : i32
    return %c0_i32, %c0_i32_0 : i32, i32
  }
  func.func @transform_2(%arg0: i32) -> (i32, i32) {
    %c0_i32 = arith.constant 0 : i32
    %c0_i32_0 = arith.constant 0 : i32
    %c0_i32_1 = arith.constant 0 : i32
    return %c0_i32, %c0_i32_0 : i32, i32
  }
  func.func @transform_3(%arg0: i32) -> (i32, i32) {
    %c0_i32 = arith.constant 0 : i32
    %c0_i32_0 = arith.constant 0 : i32
    %c0_i32_1 = arith.constant 0 : i32
    return %c0_i32, %c0_i32_0 : i32, i32
  }
  func.func @transform_4(%arg0: i32) -> (i32, i32) {
    %c0_i32 = arith.constant 0 : i32
    %c0_i32_0 = arith.constant 0 : i32
    %c0_i32_1 = arith.constant 0 : i32
    return %c0_i32, %c0_i32_0 : i32, i32
  }
  func.func @transform_5(%arg0: i32) -> (i32, i32) {
    %c0_i32 = arith.constant 0 : i32
    %c0_i32_0 = arith.constant 0 : i32
    %c0_i32_1 = arith.constant 0 : i32
    return %c0_i32, %c0_i32_0 : i32, i32
  }
  func.func @transform_6(%arg0: i32) -> (i32, i32) {
    %c0_i32 = arith.constant 0 : i32
    %c0_i32_0 = arith.constant 0 : i32
    %c0_i32_1 = arith.constant 0 : i32
    return %c0_i32, %c0_i32_0 : i32, i32
  }
  func.func @transform_7(%arg0: i32) -> (i32, i32) {
    %c0_i32 = arith.constant 0 : i32
    %c0_i32_0 = arith.constant 0 : i32
    %c0_i32_1 = arith.constant 0 : i32
    return %c0_i32, %c0_i32_0 : i32, i32
  }
  func.func @transform_8(%arg0: i32) -> (i32, i32) {
    %c0_i32 = arith.constant 0 : i32
    %c0_i32_0 = arith.constant 0 : i32
    %c0_i32_1 = arith.constant 0 : i32
    return %c0_i32, %c0_i32_0 : i32, i32
  }
  func.func @transform_9(%arg0: i32) -> (i32, i32) {
    %c0_i32 = arith.constant 0 : i32
    %c0_i32_0 = arith.constant 0 : i32
    %c0_i32_1 = arith.constant 0 : i32
    return %c0_i32, %c0_i32_0 : i32, i32
  }
  func.func @transform_10(%arg0: i32) -> (i32, i32) {
    %c0_i32 = arith.constant 0 : i32
    %c0_i32_0 = arith.constant 0 : i32
    %c0_i32_1 = arith.constant 0 : i32
    return %c0_i32, %c0_i32_0 : i32, i32
  }
  func.func @transform_11(%arg0: i32) -> (i32, i32) {
    %c0_i32 = arith.constant 0 : i32
    %c0_i32_0 = arith.constant 0 : i32
    %c0_i32_1 = arith.constant 0 : i32
    return %c0_i32, %c0_i32_0 : i32, i32
  }
  func.func @transform_12(%arg0: i32) -> (i32, i32) {
    %c0_i32 = arith.constant 0 : i32
    %c0_i32_0 = arith.constant 0 : i32
    %c0_i32_1 = arith.constant 0 : i32
    return %c0_i32, %c0_i32_0 : i32, i32
  }
  func.func @transform_13(%arg0: i32) -> (i32, i32) {
    %c0_i32 = arith.constant 0 : i32
    %c0_i32_0 = arith.constant 0 : i32
    %c0_i32_1 = arith.constant 0 : i32
    return %c0_i32, %c0_i32_0 : i32, i32
  }
  func.func @transform_14(%arg0: i32) -> (i32, i32) {
    %c0_i32 = arith.constant 0 : i32
    %c0_i32_0 = arith.constant 0 : i32
    return %arg0, %c0_i32 : i32, i32
  }
}

</mosaic_0001>

<llo_original>
// kernel: tpu_custom_call.1
$region0: #{tpu_custom_call.1}
  #allocation0 [shape = 'u32[]', space=smem, size = 0x4, offset = 0x4, fixed_abs, tag = 'smem constant byte address 0x4 - core index']
  #allocation1 [shape = 'u32[72,128]{1,0:T(1,128)}', space=vmem, size = 0x9000, scoped, tag = 'internal scratch']
  %s0 = inlined_call_operand.vmem [shape: f32[16,32], index: 0, kind: input, shape index: {}]
  %s1 = inlined_call_operand.vmem [shape: f32[8,32], index: 1, kind: input, shape index: {}]
  %s2 = inlined_call_operand.vmem [shape: f32[32,96], index: 2, kind: input, shape index: {}]
  %s3 = inlined_call_operand.vmem [shape: f32[1,96], index: 3, kind: input, shape index: {}]
  %s4 = inlined_call_operand.vmem [shape: f32[32,32], index: 4, kind: input, shape index: {}]
  %s5 = inlined_call_operand.vmem [shape: f32[1,32], index: 5, kind: input, shape index: {}]
  %s6 = inlined_call_operand.vmem [shape: f32[1,32], index: 6, kind: input, shape index: {}]
  %s7 = inlined_call_operand.vmem [shape: f32[1,32], index: 7, kind: input, shape index: {}]
  %s8 = inlined_call_operand.vmem [shape: f32[32,128], index: 8, kind: input, shape index: {}]
  %s9 = inlined_call_operand.vmem [shape: f32[1,128], index: 9, kind: input, shape index: {}]
  %s10 = inlined_call_operand.vmem [shape: f32[128,32], index: 10, kind: input, shape index: {}]
  %s11 = inlined_call_operand.vmem [shape: f32[1,32], index: 11, kind: input, shape index: {}]
  %s12 = inlined_call_operand.vmem [shape: f32[1,32], index: 12, kind: input, shape index: {}]
  %s13 = inlined_call_operand.vmem [shape: f32[1,32], index: 13, kind: input, shape index: {}]
  %s14 = inlined_call_operand.hbm [shape: f32[16,32], index: 14, kind: output, shape index: {}]
  %s15 = sld [smem:[#allocation0]]
  $region66: #{tpu_custom_call.1} parent=0
    _
  %s17 = ssub.s32 1, %s15
  %s18 = scalar_select 0, %s17, %s15
  $region1: #{tpu_custom_call.1} parent=0
    #allocation2 [shape = 'u8[8192]{0}', space=vmem, size = 0x2000, scoped, tag = 'output window, operand 0, single buffered']
    #allocation3 [shape = 's32[1]{0}', space=sflag, size = 0x4, scoped, tag = 'scoped memory for tpu_custom_call.1']
    %19 = vsyncpa [#allocation3], 0
    // Predicated region
    $region2: #{tpu_custom_call.1} parent=1 // pred_check
      _
    $region3: #{tpu_custom_call.1} parent=1 // pred_check_branch
      %21 = sbr.rel (0) target = $region5
    $region4: #{tpu_custom_call.1} parent=1 // pred_region
      _
    $region5: #{tpu_custom_call.1} parent=1 // pred_fallthru
      _
    // Predicated region
    $region6: #{tpu_custom_call.1} parent=1 // pred_check
      _
    $region7: #{tpu_custom_call.1} parent=1 // pred_check_branch
      %23 = sbr.rel (0) target = $region9
    $region8: #{tpu_custom_call.1} parent=1 // pred_region
      _
    $region9: #{tpu_custom_call.1} parent=1 // pred_fallthru
      _
    // Predicated region
    $region10: #{tpu_custom_call.1} parent=1 // pred_check
      _
    $region11: #{tpu_custom_call.1} parent=1 // pred_check_branch
      %25 = sbr.rel (0) target = $region13
    $region12: #{tpu_custom_call.1} parent=1 // pred_region
      _
    $region13: #{tpu_custom_call.1} parent=1 // pred_fallthru
      _
    // Predicated region
    $region14: #{tpu_custom_call.1} parent=1 // pred_check
      _
    $region15: #{tpu_custom_call.1} parent=1 // pred_check_branch
      %27 = sbr.rel (0) target = $region17
    $region16: #{tpu_custom_call.1} parent=1 // pred_region
      _
    $region17: #{tpu_custom_call.1} parent=1 // pred_fallthru
      _
    // Predicated region
    $region18: #{tpu_custom_call.1} parent=1 // pred_check
      _
    $region19: #{tpu_custom_call.1} parent=1 // pred_check_branch
      %29 = sbr.rel (0) target = $region21
    $region20: #{tpu_custom_call.1} parent=1 // pred_region
      _
    $region21: #{tpu_custom_call.1} parent=1 // pred_fallthru
      _
    // Predicated region
    $region22: #{tpu_custom_call.1} parent=1 // pred_check
      _
    $region23: #{tpu_custom_call.1} parent=1 // pred_check_branch
      %31 = sbr.rel (0) target = $region25
    $region24: #{tpu_custom_call.1} parent=1 // pred_region
      _
    $region25: #{tpu_custom_call.1} parent=1 // pred_fallthru
      _
    // Predicated region
    $region26: #{tpu_custom_call.1} parent=1 // pred_check
      _
    $region27: #{tpu_custom_call.1} parent=1 // pred_check_branch
      %33 = sbr.rel (0) target = $region29
    $region28: #{tpu_custom_call.1} parent=1 // pred_region
      _
    $region29: #{tpu_custom_call.1} parent=1 // pred_fallthru
      _
    // Predicated region
    $region30: #{tpu_custom_call.1} parent=1 // pred_check
      _
    $region31: #{tpu_custom_call.1} parent=1 // pred_check_branch
      %35 = sbr.rel (0) target = $region33
    $region32: #{tpu_custom_call.1} parent=1 // pred_region
      _
    $region33: #{tpu_custom_call.1} parent=1 // pred_fallthru
      _
    // Predicated region
    $region34: #{tpu_custom_call.1} parent=1 // pred_check
      _
    $region35: #{tpu_custom_call.1} parent=1 // pred_check_branch
      %37 = sbr.rel (0) target = $region37
    $region36: #{tpu_custom_call.1} parent=1 // pred_region
      _
    $region37: #{tpu_custom_call.1} parent=1 // pred_fallthru
      _
    // Predicated region
    $region38: #{tpu_custom_call.1} parent=1 // pred_check
      _
    $region39: #{tpu_custom_call.1} parent=1 // pred_check_branch
      %39 = sbr.rel (0) target = $region41
    $region40: #{tpu_custom_call.1} parent=1 // pred_region
      _
    $region41: #{tpu_custom_call.1} parent=1 // pred_fallthru
      _
    // Predicated region
    $region42: #{tpu_custom_call.1} parent=1 // pred_check
      _
    $region43: #{tpu_custom_call.1} parent=1 // pred_check_branch
      %41 = sbr.rel (0) target = $region45
    $region44: #{tpu_custom_call.1} parent=1 // pred_region
      _
    $region45: #{tpu_custom_call.1} parent=1 // pred_fallthru
      _
    // Predicated region
    $region46: #{tpu_custom_call.1} parent=1 // pred_check
      _
    $region47: #{tpu_custom_call.1} parent=1 // pred_check_branch
      %43 = sbr.rel (0) target = $region49
    $region48: #{tpu_custom_call.1} parent=1 // pred_region
      _
    $region49: #{tpu_custom_call.1} parent=1 // pred_fallthru
      _
    // Predicated region
    $region50: #{tpu_custom_call.1} parent=1 // pred_check
      _
    $region51: #{tpu_custom_call.1} parent=1 // pred_check_branch
      %45 = sbr.rel (0) target = $region53
    $region52: #{tpu_custom_call.1} parent=1 // pred_region
      _
    $region53: #{tpu_custom_call.1} parent=1 // pred_fallthru
      _
    // Predicated region
    $region54: #{tpu_custom_call.1} parent=1 // pred_check
      _
    $region55: #{tpu_custom_call.1} parent=1 // pred_check_branch
      %47 = sbr.rel (0) target = $region57
    $region56: #{tpu_custom_call.1} parent=1 // pred_region
      _
    $region57: #{tpu_custom_call.1} parent=1 // pred_fallthru
      _
    %v48 = vld [vmem:[%s0] sm:$0xff]
    %v49 = vld [vmem:[%s0 + $0x8] sm:$0xff]
    %v50 = vld [vmem:[%s1] sm:$0xff]
    %v51 = vadd.f32 %v48, %v50
    %v52 = vadd.f32 %v49, %v50
    %v53 = vld [vmem:[%s2] sm:$0xff]
    %v54 = vld [vmem:[%s2 + $0x8] sm:$0xff]
    %v55 = vld [vmem:[%s2 + $0x10] sm:$0xff]
    %v56 = vld [vmem:[%s2 + $0x18] sm:$0xff]
    %v57 = vld [vmem:[%s3] sm:$0x1]
    %v59 = vperm.slane %v57, 0
    %vm61 = vcmask 261120
    %v63 = vsel %vm61, %v51, 0
    %v66 = vsel %vm61, %v52, 0
    %68 = vmatpush.msra.mxu0 0.0
    %69 = vmatpush.msra.mxu0 0.0
    %70 = vmatpush.msra.mxu0 0.0
    %71 = vmatpush.msra.mxu0 0.0
    %72 = vmatpush.msra.mxu0 0.0
    %73 = vmatpush.msra.mxu0 0.0
    %74 = vmatpush.msra.mxu0 0.0
    %75 = vmatpush.msra.mxu0 0.0
    %76 = vmatpush.msra.mxu0 0.0
    %77 = vmatpush.msra.mxu0 0.0
    %78 = vmatpush.msra.mxu0 0.0
    %79 = vmatpush.msra.mxu0 0.0
    %80 = vmatpush.msra.mxu0 %v56
    %81 = vmatpush.msra.mxu0 %v55
    %82 = vmatpush.msra.mxu0 %v54
    %83 = vmatpush.msra.mxu0 %v53
    %84 = vmatmul.f32.gmra.mxu0 %v63
    %v85 = vpop.f32.mrf.mxu0
    %v86 = vadd.f32 %v59, %v85
    %87 = vmatmul.f32.gmra.mxu0 %v66
    %v88 = vpop.f32.mrf.mxu0
    %v89 = vadd.f32 %v59, %v88
    %90 = vdwg.mxu0
    %93 = vrot.lane.b32.xlu0 %v86, 124
    %v94 = vpop.permute.xlu0 %93
    %95 = vrot.lane.b32.xlu0 %v89, 124
    %v96 = vpop.permute.xlu0 %95
    %99 = vrot.lane.b32.xlu0 %v86, 120
    %v100 = vpop.permute.xlu0 %99
    %101 = vrot.lane.b32.xlu0 %v89, 120
    %v102 = vpop.permute.xlu0 %101
    %105 = vrot.lane.b32.xlu0 %v86, 116
    %v106 = vpop.permute.xlu0 %105
    %107 = vrot.lane.b32.xlu0 %v89, 116
    %v108 = vpop.permute.xlu0 %107
    %111 = vrot.lane.b32.xlu0 %v86, 112
    %v112 = vpop.permute.xlu0 %111
    %113 = vrot.lane.b32.xlu0 %v89, 112
    %v114 = vpop.permute.xlu0 %113
    %117 = vrot.lane.b32.xlu0 %v86, 108
    %v118 = vpop.permute.xlu0 %117
    %119 = vrot.lane.b32.xlu0 %v89, 108
    %v120 = vpop.permute.xlu0 %119
    %123 = vrot.lane.b32.xlu0 %v86, 104
    %v124 = vpop.permute.xlu0 %123
    %125 = vrot.lane.b32.xlu0 %v89, 104
    %v126 = vpop.permute.xlu0 %125
    %129 = vrot.lane.b32.xlu0 %v86, 100
    %v130 = vpop.permute.xlu0 %129
    %131 = vrot.lane.b32.xlu0 %v89, 100
    %v132 = vpop.permute.xlu0 %131
    %v135 = vmul.f32 %v86, 0.5
    %v136 = vmul.f32 %v89, 0.5
    %v137 = vmul.f32 %v94, 0.5
    %v138 = vmul.f32 %v96, 0.5
    %v139 = vmul.f32 %v100, 0.5
    %v140 = vmul.f32 %v102, 0.5
    %v141 = vmul.f32 %v106, 0.5
    %v142 = vmul.f32 %v108, 0.5
    %v143 = vmul.f32 %v112, 0.5
    %v144 = vmul.f32 %v114, 0.5
    %v145 = vmul.f32 %v118, 0.5
    %v146 = vmul.f32 %v120, 0.5
    %v147 = vmul.f32 %v124, 0.5
    %v148 = vmul.f32 %v126, 0.5
    %v149 = vmul.f32 %v130, 0.5
    %v150 = vmul.f32 %v132, 0.5
    %151 = vrot.lane.b32.xlu0 %v86, 96
    %v152 = vpop.permute.xlu0 %151
    %vm153 = vcmask 31744
    %v155 = vsel %vm153, %v135, 0
    %v157 = vsel %vm153, %v152, 0
    %159 = vmatpush.xpose.msra.mxu0 0.0
    %160 = vmatpush.xpose.msra.mxu0 0.0
    %161 = vmatpush.xpose.msra.mxu0 0.0
    %162 = vmatpush.xpose.msra.mxu0 0.0
    %163 = vmatpush.xpose.msra.mxu0 0.0
    %164 = vmatpush.xpose.msra.mxu0 0.0
    %165 = vmatpush.xpose.msra.mxu0 0.0
    %166 = vmatpush.xpose.msra.mxu0 0.0
    %167 = vmatpush.xpose.msra.mxu0 0.0
    %168 = vmatpush.xpose.msra.mxu0 0.0
    %169 = vmatpush.xpose.msra.mxu0 0.0
    %170 = vmatpush.xpose.msra.mxu0 0.0
    %171 = vmatpush.xpose.msra.mxu0 0.0
    %172 = vmatpush.xpose.msra.mxu0 0.0
    %173 = vmatpush.xpose.msra.mxu0 0.0
    %174 = vmatpush.xpose.msra.mxu0 %v157
    %175 = vmatmul.f32.gmra.mxu0 %v155
    %v176 = vpop.f32.mrf.mxu0
    %v177 = vadd.f32 0.0, %v176
    %178 = vdwg.mxu0
    %179 = vrot.lane.b32.xlu0 %v89, 96
    %v180 = vpop.permute.xlu0 %179
    %v182 = vsel %vm153, %v136, 0
    %v184 = vsel %vm153, %v180, 0
    %186 = vmatpush.xpose.msra.mxu0 0.0
    %187 = vmatpush.xpose.msra.mxu0 0.0
    %188 = vmatpush.xpose.msra.mxu0 0.0
    %189 = vmatpush.xpose.msra.mxu0 0.0
    %190 = vmatpush.xpose.msra.mxu0 0.0
    %191 = vmatpush.xpose.msra.mxu0 0.0
    %192 = vmatpush.xpose.msra.mxu0 0.0
    %193 = vmatpush.xpose.msra.mxu0 0.0
    %194 = vmatpush.xpose.msra.mxu0 0.0
    %195 = vmatpush.xpose.msra.mxu0 0.0
    %196 = vmatpush.xpose.msra.mxu0 0.0
    %197 = vmatpush.xpose.msra.mxu0 0.0
    %198 = vmatpush.xpose.msra.mxu0 0.0
    %199 = vmatpush.xpose.msra.mxu0 0.0
    %200 = vmatpush.xpose.msra.mxu0 0.0
    %201 = vmatpush.xpose.msra.mxu0 %v184
    %202 = vmatmul.f32.gmra.mxu0 %v182
    %v203 = vpop.f32.mrf.mxu0
    %v204 = vadd.f32 0.0, %v203
    %205 = vdwg.mxu0
    %206 = vrot.lane.b32.xlu0 %v94, 96
    %v207 = vpop.permute.xlu0 %206
    %v209 = vsel %vm153, %v137, 0
    %v211 = vsel %vm153, %v207, 0
    %213 = vmatpush.xpose.msra.mxu0 0.0
    %214 = vmatpush.xpose.msra.mxu0 0.0
    %215 = vmatpush.xpose.msra.mxu0 0.0
    %216 = vmatpush.xpose.msra.mxu0 0.0
    %217 = vmatpush.xpose.msra.mxu0 0.0
    %218 = vmatpush.xpose.msra.mxu0 0.0
    %219 = vmatpush.xpose.msra.mxu0 0.0
    %220 = vmatpush.xpose.msra.mxu0 0.0
    %221 = vmatpush.xpose.msra.mxu0 0.0
    %222 = vmatpush.xpose.msra.mxu0 0.0
    %223 = vmatpush.xpose.msra.mxu0 0.0
    %224 = vmatpush.xpose.msra.mxu0 0.0
    %225 = vmatpush.xpose.msra.mxu0 0.0
    %226 = vmatpush.xpose.msra.mxu0 0.0
    %227 = vmatpush.xpose.msra.mxu0 0.0
    %228 = vmatpush.xpose.msra.mxu0 %v211
    %229 = vmatmul.f32.gmra.mxu0 %v209
    %v230 = vpop.f32.mrf.mxu0
    %v231 = vadd.f32 0.0, %v230
    %232 = vdwg.mxu0
    %233 = vrot.lane.b32.xlu0 %v96, 96
    %v234 = vpop.permute.xlu0 %233
    %v236 = vsel %vm153, %v138, 0
    %v238 = vsel %vm153, %v234, 0
    %240 = vmatpush.xpose.msra.mxu0 0.0
    %241 = vmatpush.xpose.msra.mxu0 0.0
    %242 = vmatpush.xpose.msra.mxu0 0.0
    %243 = vmatpush.xpose.msra.mxu0 0.0
    %244 = vmatpush.xpose.msra.mxu0 0.0
    %245 = vmatpush.xpose.msra.mxu0 0.0
    %246 = vmatpush.xpose.msra.mxu0 0.0
    %247 = vmatpush.xpose.msra.mxu0 0.0
    %248 = vmatpush.xpose.msra.mxu0 0.0
    %249 = vmatpush.xpose.msra.mxu0 0.0
    %250 = vmatpush.xpose.msra.mxu0 0.0
    %251 = vmatpush.xpose.msra.mxu0 0.0
    %252 = vmatpush.xpose.msra.mxu0 0.0
    %253 = vmatpush.xpose.msra.mxu0 0.0
    %254 = vmatpush.xpose.msra.mxu0 0.0
    %255 = vmatpush.xpose.msra.mxu0 %v238
    %256 = vmatmul.f32.gmra.mxu0 %v236
    %v257 = vpop.f32.mrf.mxu0
    %v258 = vadd.f32 0.0, %v257
    %259 = vdwg.mxu0
    %260 = vrot.lane.b32.xlu0 %v100, 96
    %v261 = vpop.permute.xlu0 %260
    %v263 = vsel %vm153, %v139, 0
    %v265 = vsel %vm153, %v261, 0
    %267 = vmatpush.xpose.msra.mxu0 0.0
    %268 = vmatpush.xpose.msra.mxu0 0.0
    %269 = vmatpush.xpose.msra.mxu0 0.0
    %270 = vmatpush.xpose.msra.mxu0 0.0
    %271 = vmatpush.xpose.msra.mxu0 0.0
    %272 = vmatpush.xpose.msra.mxu0 0.0
    %273 = vmatpush.xpose.msra.mxu0 0.0
    %274 = vmatpush.xpose.msra.mxu0 0.0
    %275 = vmatpush.xpose.msra.mxu0 0.0
    %276 = vmatpush.xpose.msra.mxu0 0.0
    %277 = vmatpush.xpose.msra.mxu0 0.0
    %278 = vmatpush.xpose.msra.mxu0 0.0
    %279 = vmatpush.xpose.msra.mxu0 0.0
    %280 = vmatpush.xpose.msra.mxu0 0.0
    %281 = vmatpush.xpose.msra.mxu0 0.0
    %282 = vmatpush.xpose.msra.mxu0 %v265
    %283 = vmatmul.f32.gmra.mxu0 %v263
    %v284 = vpop.f32.mrf.mxu0
    %v285 = vadd.f32 0.0, %v284
    %286 = vdwg.mxu0
    %287 = vrot.lane.b32.xlu0 %v102, 96
    %v288 = vpop.permute.xlu0 %287
    %v290 = vsel %vm153, %v140, 0
    %v292 = vsel %vm153, %v288, 0
    %294 = vmatpush.xpose.msra.mxu0 0.0
    %295 = vmatpush.xpose.msra.mxu0 0.0
    %296 = vmatpush.xpose.msra.mxu0 0.0
    %297 = vmatpush.xpose.msra.mxu0 0.0
    %298 = vmatpush.xpose.msra.mxu0 0.0
    %299 = vmatpush.xpose.msra.mxu0 0.0
    %300 = vmatpush.xpose.msra.mxu0 0.0
    %301 = vmatpush.xpose.msra.mxu0 0.0
    %302 = vmatpush.xpose.msra.mxu0 0.0
    %303 = vmatpush.xpose.msra.mxu0 0.0
    %304 = vmatpush.xpose.msra.mxu0 0.0
    %305 = vmatpush.xpose.msra.mxu0 0.0
    %306 = vmatpush.xpose.msra.mxu0 0.0
    %307 = vmatpush.xpose.msra.mxu0 0.0
    %308 = vmatpush.xpose.msra.mxu0 0.0
    %309 = vmatpush.xpose.msra.mxu0 %v292
    %310 = vmatmul.f32.gmra.mxu0 %v290
    %v311 = vpop.f32.mrf.mxu0
    %v312 = vadd.f32 0.0, %v311
    %313 = vdwg.mxu0
    %314 = vrot.lane.b32.xlu0 %v106, 96
    %v315 = vpop.permute.xlu0 %314
    %v317 = vsel %vm153, %v141, 0
    %v319 = vsel %vm153, %v315, 0
    %321 = vmatpush.xpose.msra.mxu0 0.0
    %322 = vmatpush.xpose.msra.mxu0 0.0
    %323 = vmatpush.xpose.msra.mxu0 0.0
    %324 = vmatpush.xpose.msra.mxu0 0.0
    %325 = vmatpush.xpose.msra.mxu0 0.0
    %326 = vmatpush.xpose.msra.mxu0 0.0
    %327 = vmatpush.xpose.msra.mxu0 0.0
    %328 = vmatpush.xpose.msra.mxu0 0.0
    %329 = vmatpush.xpose.msra.mxu0 0.0
    %330 = vmatpush.xpose.msra.mxu0 0.0
    %331 = vmatpush.xpose.msra.mxu0 0.0
    %332 = vmatpush.xpose.msra.mxu0 0.0
    %333 = vmatpush.xpose.msra.mxu0 0.0
    %334 = vmatpush.xpose.msra.mxu0 0.0
    %335 = vmatpush.xpose.msra.mxu0 0.0
    %336 = vmatpush.xpose.msra.mxu0 %v319
    %337 = vmatmul.f32.gmra.mxu0 %v317
    %v338 = vpop.f32.mrf.mxu0
    %v339 = vadd.f32 0.0, %v338
    %340 = vdwg.mxu0
    %341 = vrot.lane.b32.xlu0 %v108, 96
    %v342 = vpop.permute.xlu0 %341
    %v344 = vsel %vm153, %v142, 0
    %v346 = vsel %vm153, %v342, 0
    %348 = vmatpush.xpose.msra.mxu0 0.0
    %349 = vmatpush.xpose.msra.mxu0 0.0
    %350 = vmatpush.xpose.msra.mxu0 0.0
    %351 = vmatpush.xpose.msra.mxu0 0.0
    %352 = vmatpush.xpose.msra.mxu0 0.0
    %353 = vmatpush.xpose.msra.mxu0 0.0
    %354 = vmatpush.xpose.msra.mxu0 0.0
    %355 = vmatpush.xpose.msra.mxu0 0.0
    %356 = vmatpush.xpose.msra.mxu0 0.0
    %357 = vmatpush.xpose.msra.mxu0 0.0
    %358 = vmatpush.xpose.msra.mxu0 0.0
    %359 = vmatpush.xpose.msra.mxu0 0.0
    %360 = vmatpush.xpose.msra.mxu0 0.0
    %361 = vmatpush.xpose.msra.mxu0 0.0
    %362 = vmatpush.xpose.msra.mxu0 0.0
    %363 = vmatpush.xpose.msra.mxu0 %v346
    %364 = vmatmul.f32.gmra.mxu0 %v344
    %v365 = vpop.f32.mrf.mxu0
    %v366 = vadd.f32 0.0, %v365
    %367 = vdwg.mxu0
    %368 = vrot.lane.b32.xlu0 %v112, 96
    %v369 = vpop.permute.xlu0 %368
    %v371 = vsel %vm153, %v143, 0
    %v373 = vsel %vm153, %v369, 0
    %375 = vmatpush.xpose.msra.mxu0 0.0
    %376 = vmatpush.xpose.msra.mxu0 0.0
    %377 = vmatpush.xpose.msra.mxu0 0.0
    %378 = vmatpush.xpose.msra.mxu0 0.0
    %379 = vmatpush.xpose.msra.mxu0 0.0
    %380 = vmatpush.xpose.msra.mxu0 0.0
    %381 = vmatpush.xpose.msra.mxu0 0.0
    %382 = vmatpush.xpose.msra.mxu0 0.0
    %383 = vmatpush.xpose.msra.mxu0 0.0
    %384 = vmatpush.xpose.msra.mxu0 0.0
    %385 = vmatpush.xpose.msra.mxu0 0.0
    %386 = vmatpush.xpose.msra.mxu0 0.0
    %387 = vmatpush.xpose.msra.mxu0 0.0
    %388 = vmatpush.xpose.msra.mxu0 0.0
    %389 = vmatpush.xpose.msra.mxu0 0.0
    %390 = vmatpush.xpose.msra.mxu0 %v373
    %391 = vmatmul.f32.gmra.mxu0 %v371
    %v392 = vpop.f32.mrf.mxu0
    %v393 = vadd.f32 0.0, %v392
    %394 = vdwg.mxu0
    %395 = vrot.lane.b32.xlu0 %v114, 96
    %v396 = vpop.permute.xlu0 %395
    %v398 = vsel %vm153, %v144, 0
    %v400 = vsel %vm153, %v396, 0
    %402 = vmatpush.xpose.msra.mxu0 0.0
    %403 = vmatpush.xpose.msra.mxu0 0.0
    %404 = vmatpush.xpose.msra.mxu0 0.0
    %405 = vmatpush.xpose.msra.mxu0 0.0
    %406 = vmatpush.xpose.msra.mxu0 0.0
    %407 = vmatpush.xpose.msra.mxu0 0.0
    %408 = vmatpush.xpose.msra.mxu0 0.0
    %409 = vmatpush.xpose.msra.mxu0 0.0
    %410 = vmatpush.xpose.msra.mxu0 0.0
    %411 = vmatpush.xpose.msra.mxu0 0.0
    %412 = vmatpush.xpose.msra.mxu0 0.0
    %413 = vmatpush.xpose.msra.mxu0 0.0
    %414 = vmatpush.xpose.msra.mxu0 0.0
    %415 = vmatpush.xpose.msra.mxu0 0.0
    %416 = vmatpush.xpose.msra.mxu0 0.0
    %417 = vmatpush.xpose.msra.mxu0 %v400
    %418 = vmatmul.f32.gmra.mxu0 %v398
    %v419 = vpop.f32.mrf.mxu0
    %v420 = vadd.f32 0.0, %v419
    %421 = vdwg.mxu0
    %422 = vrot.lane.b32.xlu0 %v118, 96
    %v423 = vpop.permute.xlu0 %422
    %v425 = vsel %vm153, %v145, 0
    %v427 = vsel %vm153, %v423, 0
    %429 = vmatpush.xpose.msra.mxu0 0.0
    %430 = vmatpush.xpose.msra.mxu0 0.0
    %431 = vmatpush.xpose.msra.mxu0 0.0
    %432 = vmatpush.xpose.msra.mxu0 0.0
    %433 = vmatpush.xpose.msra.mxu0 0.0
    %434 = vmatpush.xpose.msra.mxu0 0.0
    %435 = vmatpush.xpose.msra.mxu0 0.0
    %436 = vmatpush.xpose.msra.mxu0 0.0
    %437 = vmatpush.xpose.msra.mxu0 0.0
    %438 = vmatpush.xpose.msra.mxu0 0.0
    %439 = vmatpush.xpose.msra.mxu0 0.0
    %440 = vmatpush.xpose.msra.mxu0 0.0
    %441 = vmatpush.xpose.msra.mxu0 0.0
    %442 = vmatpush.xpose.msra.mxu0 0.0
    %443 = vmatpush.xpose.msra.mxu0 0.0
    %444 = vmatpush.xpose.msra.mxu0 %v427
    %445 = vmatmul.f32.gmra.mxu0 %v425
    %v446 = vpop.f32.mrf.mxu0
    %v447 = vadd.f32 0.0, %v446
    %448 = vdwg.mxu0
    %449 = vrot.lane.b32.xlu0 %v120, 96
    %v450 = vpop.permute.xlu0 %449
    %v452 = vsel %vm153, %v146, 0
    %v454 = vsel %vm153, %v450, 0
    %456 = vmatpush.xpose.msra.mxu0 0.0
    %457 = vmatpush.xpose.msra.mxu0 0.0
    %458 = vmatpush.xpose.msra.mxu0 0.0
    %459 = vmatpush.xpose.msra.mxu0 0.0
    %460 = vmatpush.xpose.msra.mxu0 0.0
    %461 = vmatpush.xpose.msra.mxu0 0.0
    %462 = vmatpush.xpose.msra.mxu0 0.0
    %463 = vmatpush.xpose.msra.mxu0 0.0
    %464 = vmatpush.xpose.msra.mxu0 0.0
    %465 = vmatpush.xpose.msra.mxu0 0.0
    %466 = vmatpush.xpose.msra.mxu0 0.0
    %467 = vmatpush.xpose.msra.mxu0 0.0
    %468 = vmatpush.xpose.msra.mxu0 0.0
    %469 = vmatpush.xpose.msra.mxu0 0.0
    %470 = vmatpush.xpose.msra.mxu0 0.0
    %471 = vmatpush.xpose.msra.mxu0 %v454
    %472 = vmatmul.f32.gmra.mxu0 %v452
    %v473 = vpop.f32.mrf.mxu0
    %v474 = vadd.f32 0.0, %v473
    %475 = vdwg.mxu0
    %476 = vrot.lane.b32.xlu0 %v124, 96
    %v477 = vpop.permute.xlu0 %476
    %v479 = vsel %vm153, %v147, 0
    %v481 = vsel %vm153, %v477, 0
    %483 = vmatpush.xpose.msra.mxu0 0.0
    %484 = vmatpush.xpose.msra.mxu0 0.0
    %485 = vmatpush.xpose.msra.mxu0 0.0
    %486 = vmatpush.xpose.msra.mxu0 0.0
    %487 = vmatpush.xpose.msra.mxu0 0.0
    %488 = vmatpush.xpose.msra.mxu0 0.0
    %489 = vmatpush.xpose.msra.mxu0 0.0
    %490 = vmatpush.xpose.msra.mxu0 0.0
    %491 = vmatpush.xpose.msra.mxu0 0.0
    %492 = vmatpush.xpose.msra.mxu0 0.0
    %493 = vmatpush.xpose.msra.mxu0 0.0
    %494 = vmatpush.xpose.msra.mxu0 0.0
    %495 = vmatpush.xpose.msra.mxu0 0.0
    %496 = vmatpush.xpose.msra.mxu0 0.0
    %497 = vmatpush.xpose.msra.mxu0 0.0
    %498 = vmatpush.xpose.msra.mxu0 %v481
    %499 = vmatmul.f32.gmra.mxu0 %v479
    %v500 = vpop.f32.mrf.mxu0
    %v501 = vadd.f32 0.0, %v500
    %502 = vdwg.mxu0
    %503 = vrot.lane.b32.xlu0 %v126, 96
    %v504 = vpop.permute.xlu0 %503
    %v506 = vsel %vm153, %v148, 0
    %v508 = vsel %vm153, %v504, 0
    %510 = vmatpush.xpose.msra.mxu0 0.0
    %511 = vmatpush.xpose.msra.mxu0 0.0
    %512 = vmatpush.xpose.msra.mxu0 0.0
    %513 = vmatpush.xpose.msra.mxu0 0.0
    %514 = vmatpush.xpose.msra.mxu0 0.0
    %515 = vmatpush.xpose.msra.mxu0 0.0
    %516 = vmatpush.xpose.msra.mxu0 0.0
    %517 = vmatpush.xpose.msra.mxu0 0.0
    %518 = vmatpush.xpose.msra.mxu0 0.0
    %519 = vmatpush.xpose.msra.mxu0 0.0
    %520 = vmatpush.xpose.msra.mxu0 0.0
    %521 = vmatpush.xpose.msra.mxu0 0.0
    %522 = vmatpush.xpose.msra.mxu0 0.0
    %523 = vmatpush.xpose.msra.mxu0 0.0
    %524 = vmatpush.xpose.msra.mxu0 0.0
    %525 = vmatpush.xpose.msra.mxu0 %v508
    %526 = vmatmul.f32.gmra.mxu0 %v506
    %v527 = vpop.f32.mrf.mxu0
    %v528 = vadd.f32 0.0, %v527
    %529 = vdwg.mxu0
    %530 = vrot.lane.b32.xlu0 %v130, 96
    %v531 = vpop.permute.xlu0 %530
    %v533 = vsel %vm153, %v149, 0
    %v535 = vsel %vm153, %v531, 0
    %537 = vmatpush.xpose.msra.mxu0 0.0
    %538 = vmatpush.xpose.msra.mxu0 0.0
    %539 = vmatpush.xpose.msra.mxu0 0.0
    %540 = vmatpush.xpose.msra.mxu0 0.0
    %541 = vmatpush.xpose.msra.mxu0 0.0
    %542 = vmatpush.xpose.msra.mxu0 0.0
    %543 = vmatpush.xpose.msra.mxu0 0.0
    %544 = vmatpush.xpose.msra.mxu0 0.0
    %545 = vmatpush.xpose.msra.mxu0 0.0
    %546 = vmatpush.xpose.msra.mxu0 0.0
    %547 = vmatpush.xpose.msra.mxu0 0.0
    %548 = vmatpush.xpose.msra.mxu0 0.0
    %549 = vmatpush.xpose.msra.mxu0 0.0
    %550 = vmatpush.xpose.msra.mxu0 0.0
    %551 = vmatpush.xpose.msra.mxu0 0.0
    %552 = vmatpush.xpose.msra.mxu0 %v535
    %553 = vmatmul.f32.gmra.mxu0 %v533
    %v554 = vpop.f32.mrf.mxu0
    %v555 = vadd.f32 0.0, %v554
    %556 = vdwg.mxu0
    %557 = vrot.lane.b32.xlu0 %v132, 96
    %v558 = vpop.permute.xlu0 %557
    %v560 = vsel %vm153, %v150, 0
    %v562 = vsel %vm153, %v558, 0
    %564 = vmatpush.xpose.msra.mxu0 0.0
    %565 = vmatpush.xpose.msra.mxu0 0.0
    %566 = vmatpush.xpose.msra.mxu0 0.0
    %567 = vmatpush.xpose.msra.mxu0 0.0
    %568 = vmatpush.xpose.msra.mxu0 0.0
    %569 = vmatpush.xpose.msra.mxu0 0.0
    %570 = vmatpush.xpose.msra.mxu0 0.0
    %571 = vmatpush.xpose.msra.mxu0 0.0
    %572 = vmatpush.xpose.msra.mxu0 0.0
    %573 = vmatpush.xpose.msra.mxu0 0.0
    %574 = vmatpush.xpose.msra.mxu0 0.0
    %575 = vmatpush.xpose.msra.mxu0 0.0
    %576 = vmatpush.xpose.msra.mxu0 0.0
    %577 = vmatpush.xpose.msra.mxu0 0.0
    %578 = vmatpush.xpose.msra.mxu0 0.0
    %579 = vmatpush.xpose.msra.mxu0 %v562
    %580 = vmatmul.f32.gmra.mxu0 %v560
    %v581 = vpop.f32.mrf.mxu0
    %v582 = vadd.f32 0.0, %v581
    %583 = vdwg.mxu0
    %vm584 = vcmask 64512
    %v585 = vsel %vm584, %v177, -inf
    %586 = vmax.xlane.f32.xlu0 %v585
    %v587 = vpop.xlane.xlu0 %586
    %v588 = vsel %vm584, %v204, -inf
    %589 = vmax.xlane.f32.xlu0 %v588
    %v590 = vpop.xlane.xlu0 %589
    %v591 = vsel %vm584, %v231, -inf
    %592 = vmax.xlane.f32.xlu0 %v591
    %v593 = vpop.xlane.xlu0 %592
    %v594 = vsel %vm584, %v258, -inf
    %595 = vmax.xlane.f32.xlu0 %v594
    %v596 = vpop.xlane.xlu0 %595
    %v597 = vsel %vm584, %v285, -inf
    %598 = vmax.xlane.f32.xlu0 %v597
    %v599 = vpop.xlane.xlu0 %598
    %v600 = vsel %vm584, %v312, -inf
    %601 = vmax.xlane.f32.xlu0 %v600
    %v602 = vpop.xlane.xlu0 %601
    %v603 = vsel %vm584, %v339, -inf
    %604 = vmax.xlane.f32.xlu0 %v603
    %v605 = vpop.xlane.xlu0 %604
    %v606 = vsel %vm584, %v366, -inf
    %607 = vmax.xlane.f32.xlu0 %v606
    %v608 = vpop.xlane.xlu0 %607
    %v609 = vsel %vm584, %v393, -inf
    %610 = vmax.xlane.f32.xlu0 %v609
    %v611 = vpop.xlane.xlu0 %610
    %v612 = vsel %vm584, %v420, -inf
    %613 = vmax.xlane.f32.xlu0 %v612
    %v614 = vpop.xlane.xlu0 %613
    %v615 = vsel %vm584, %v447, -inf
    %616 = vmax.xlane.f32.xlu0 %v615
    %v617 = vpop.xlane.xlu0 %616
    %v618 = vsel %vm584, %v474, -inf
    %619 = vmax.xlane.f32.xlu0 %v618
    %v620 = vpop.xlane.xlu0 %619
    %v621 = vsel %vm584, %v501, -inf
    %622 = vmax.xlane.f32.xlu0 %v621
    %v623 = vpop.xlane.xlu0 %622
    %v624 = vsel %vm584, %v528, -inf
    %625 = vmax.xlane.f32.xlu0 %v624
    %v626 = vpop.xlane.xlu0 %625
    %v627 = vsel %vm584, %v555, -inf
    %628 = vmax.xlane.f32.xlu0 %v627
    %v629 = vpop.xlane.xlu0 %628
    %v630 = vsel %vm584, %v582, -inf
    %631 = vmax.xlane.f32.xlu0 %v630
    %v632 = vpop.xlane.xlu0 %631
    %v633 = vsub.f32 %v177, %v587
    %v634 = vsub.f32 %v204, %v590
    %v635 = vsub.f32 %v231, %v593
    %v636 = vsub.f32 %v258, %v596
    %v637 = vsub.f32 %v285, %v599
    %v638 = vsub.f32 %v312, %v602
    %v639 = vsub.f32 %v339, %v605
    %v640 = vsub.f32 %v366, %v608
    %v641 = vsub.f32 %v393, %v611
    %v642 = vsub.f32 %v420, %v614
    %v643 = vsub.f32 %v447, %v617
    %v644 = vsub.f32 %v474, %v620
    %v645 = vsub.f32 %v501, %v623
    %v646 = vsub.f32 %v528, %v626
    %v647 = vsub.f32 %v555, %v629
    %v648 = vsub.f32 %v582, %v632
    %v649 = vmul.f32 %v633, 1.442695
    %v650 = vpow.pop %v649
    %v651 = vmul.f32 %v634, 1.442695
    %v652 = vpow.pop %v651
    %v653 = vmul.f32 %v635, 1.442695
    %v654 = vpow.pop %v653
    %v655 = vmul.f32 %v636, 1.442695
    %v656 = vpow.pop %v655
    %v657 = vmul.f32 %v637, 1.442695
    %v658 = vpow.pop %v657
    %v659 = vmul.f32 %v638, 1.442695
    %v660 = vpow.pop %v659
    %v661 = vmul.f32 %v639, 1.442695
    %v662 = vpow.pop %v661
    %v663 = vmul.f32 %v640, 1.442695
    %v664 = vpow.pop %v663
    %v665 = vmul.f32 %v641, 1.442695
    %v666 = vpow.pop %v665
    %v667 = vmul.f32 %v642, 1.442695
    %v668 = vpow.pop %v667
    %v669 = vmul.f32 %v643, 1.442695
    %v670 = vpow.pop %v669
    %v671 = vmul.f32 %v644, 1.442695
    %v672 = vpow.pop %v671
    %v673 = vmul.f32 %v645, 1.442695
    %v674 = vpow.pop %v673
    %v675 = vmul.f32 %v646, 1.442695
    %v676 = vpow.pop %v675
    %v677 = vmul.f32 %v647, 1.442695
    %v678 = vpow.pop %v677
    %v679 = vmul.f32 %v648, 1.442695
    %v680 = vpow.pop %v679
    %v681 = vsel %vm584, %v650, 0.0
    %682 = vadd.xlane.f32.xlu0 %v681
    %v683 = vpop.xlane.xlu0 %682
    %v684 = vsel %vm584, %v652, 0.0
    %685 = vadd.xlane.f32.xlu0 %v684
    %v686 = vpop.xlane.xlu0 %685
    %v687 = vsel %vm584, %v654, 0.0
    %688 = vadd.xlane.f32.xlu0 %v687
    %v689 = vpop.xlane.xlu0 %688
    %v690 = vsel %vm584, %v656, 0.0
    %691 = vadd.xlane.f32.xlu0 %v690
    %v692 = vpop.xlane.xlu0 %691
    %v693 = vsel %vm584, %v658, 0.0
    %694 = vadd.xlane.f32.xlu0 %v693
    %v695 = vpop.xlane.xlu0 %694
    %v696 = vsel %vm584, %v660, 0.0
    %697 = vadd.xlane.f32.xlu0 %v696
    %v698 = vpop.xlane.xlu0 %697
    %v699 = vsel %vm584, %v662, 0.0
    %700 = vadd.xlane.f32.xlu0 %v699
    %v701 = vpop.xlane.xlu0 %700
    %v702 = vsel %vm584, %v664, 0.0
    %703 = vadd.xlane.f32.xlu0 %v702
    %v704 = vpop.xlane.xlu0 %703
    %v705 = vsel %vm584, %v666, 0.0
    %706 = vadd.xlane.f32.xlu0 %v705
    %v707 = vpop.xlane.xlu0 %706
    %v708 = vsel %vm584, %v668, 0.0
    %709 = vadd.xlane.f32.xlu0 %v708
    %v710 = vpop.xlane.xlu0 %709
    %v711 = vsel %vm584, %v670, 0.0
    %712 = vadd.xlane.f32.xlu0 %v711
    %v713 = vpop.xlane.xlu0 %712
    %v714 = vsel %vm584, %v672, 0.0
    %715 = vadd.xlane.f32.xlu0 %v714
    %v716 = vpop.xlane.xlu0 %715
    %v717 = vsel %vm584, %v674, 0.0
    %718 = vadd.xlane.f32.xlu0 %v717
    %v719 = vpop.xlane.xlu0 %718
    %v720 = vsel %vm584, %v676, 0.0
    %721 = vadd.xlane.f32.xlu0 %v720
    %v722 = vpop.xlane.xlu0 %721
    %v723 = vsel %vm584, %v678, 0.0
    %724 = vadd.xlane.f32.xlu0 %v723
    %v725 = vpop.xlane.xlu0 %724
    %v726 = vsel %vm584, %v680, 0.0
    %727 = vadd.xlane.f32.xlu0 %v726
    %v728 = vpop.xlane.xlu0 %727
    %v729 = vrcp.pop %v683
    %v730 = vmul.f32 %v683, %v729
    %v731 = vsub.f32 1.0, %v730
    %v732 = vmul.f32 %v729, %v731
    %v733 = vadd.f32 %v729, %v732
    %vm734 = vweird.f32 %v683
    %vm735 = vweird.f32 %v729
    %vm736 = vmor %vm734, %vm735
    %v737 = vsel %vm736, %v729, %v733
    %v738 = vand.u32 2147483647, %v683
    %vm739 = vcmp.eq.f32.partialorder %v738, 8.507059e+37
    %v740 = vand.u32 %v683, 2147483648
    %v741 = vor.u32 1.1754944e-38, %v740
    %v742 = vsel %vm739, %v741, %v737
    %v743 = vmul.f32 %v650, %v742
    %v744 = vrcp.pop %v686
    %v745 = vmul.f32 %v686, %v744
    %v746 = vsub.f32 1.0, %v745
    %v747 = vmul.f32 %v744, %v746
    %v748 = vadd.f32 %v744, %v747
    %vm749 = vweird.f32 %v686
    %vm750 = vweird.f32 %v744
    %vm751 = vmor %vm749, %vm750
    %v752 = vsel %vm751, %v744, %v748
    %v753 = vand.u32 2147483647, %v686
    %vm754 = vcmp.eq.f32.partialorder %v753, 8.507059e+37
    %v755 = vand.u32 %v686, 2147483648
    %v756 = vor.u32 1.1754944e-38, %v755
    %v757 = vsel %vm754, %v756, %v752
    %v758 = vmul.f32 %v652, %v757
    %v759 = vrcp.pop %v689
    %v760 = vmul.f32 %v689, %v759
    %v761 = vsub.f32 1.0, %v760
    %v762 = vmul.f32 %v759, %v761
    %v763 = vadd.f32 %v759, %v762
    %vm764 = vweird.f32 %v689
    %vm765 = vweird.f32 %v759
    %vm766 = vmor %vm764, %vm765
    %v767 = vsel %vm766, %v759, %v763
    %v768 = vand.u32 2147483647, %v689
    %vm769 = vcmp.eq.f32.partialorder %v768, 8.507059e+37
    %v770 = vand.u32 %v689, 2147483648
    %v771 = vor.u32 1.1754944e-38, %v770
    %v772 = vsel %vm769, %v771, %v767
    %v773 = vmul.f32 %v654, %v772
    %v774 = vrcp.pop %v692
    %v775 = vmul.f32 %v692, %v774
    %v776 = vsub.f32 1.0, %v775
    %v777 = vmul.f32 %v774, %v776
    %v778 = vadd.f32 %v774, %v777
    %vm779 = vweird.f32 %v692
    %vm780 = vweird.f32 %v774
    %vm781 = vmor %vm779, %vm780
    %v782 = vsel %vm781, %v774, %v778
    %v783 = vand.u32 2147483647, %v692
    %vm784 = vcmp.eq.f32.partialorder %v783, 8.507059e+37
    %v785 = vand.u32 %v692, 2147483648
    %v786 = vor.u32 1.1754944e-38, %v785
    %v787 = vsel %vm784, %v786, %v782
    %v788 = vmul.f32 %v656, %v787
    %v789 = vrcp.pop %v695
    %v790 = vmul.f32 %v695, %v789
    %v791 = vsub.f32 1.0, %v790
    %v792 = vmul.f32 %v789, %v791
    %v793 = vadd.f32 %v789, %v792
    %vm794 = vweird.f32 %v695
    %vm795 = vweird.f32 %v789
    %vm796 = vmor %vm794, %vm795
    %v797 = vsel %vm796, %v789, %v793
    %v798 = vand.u32 2147483647, %v695
    %vm799 = vcmp.eq.f32.partialorder %v798, 8.507059e+37
    %v800 = vand.u32 %v695, 2147483648
    %v801 = vor.u32 1.1754944e-38, %v800
    %v802 = vsel %vm799, %v801, %v797
    %v803 = vmul.f32 %v658, %v802
    %v804 = vrcp.pop %v698
    %v805 = vmul.f32 %v698, %v804
    %v806 = vsub.f32 1.0, %v805
    %v807 = vmul.f32 %v804, %v806
    %v808 = vadd.f32 %v804, %v807
    %vm809 = vweird.f32 %v698
    %vm810 = vweird.f32 %v804
    %vm811 = vmor %vm809, %vm810
    %v812 = vsel %vm811, %v804, %v808
    %v813 = vand.u32 2147483647, %v698
    %vm814 = vcmp.eq.f32.partialorder %v813, 8.507059e+37
    %v815 = vand.u32 %v698, 2147483648
    %v816 = vor.u32 1.1754944e-38, %v815
    %v817 = vsel %vm814, %v816, %v812
    %v818 = vmul.f32 %v660, %v817
    %v819 = vrcp.pop %v701
    %v820 = vmul.f32 %v701, %v819
    %v821 = vsub.f32 1.0, %v820
    %v822 = vmul.f32 %v819, %v821
    %v823 = vadd.f32 %v819, %v822
    %vm824 = vweird.f32 %v701
    %vm825 = vweird.f32 %v819
    %vm826 = vmor %vm824, %vm825
    %v827 = vsel %vm826, %v819, %v823
    %v828 = vand.u32 2147483647, %v701
    %vm829 = vcmp.eq.f32.partialorder %v828, 8.507059e+37
    %v830 = vand.u32 %v701, 2147483648
    %v831 = vor.u32 1.1754944e-38, %v830
    %v832 = vsel %vm829, %v831, %v827
    %v833 = vmul.f32 %v662, %v832
    %v834 = vrcp.pop %v704
    %v835 = vmul.f32 %v704, %v834
    %v836 = vsub.f32 1.0, %v835
    %v837 = vmul.f32 %v834, %v836
    %v838 = vadd.f32 %v834, %v837
    %vm839 = vweird.f32 %v704
    %vm840 = vweird.f32 %v834
    %vm841 = vmor %vm839, %vm840
    %v842 = vsel %vm841, %v834, %v838
    %v843 = vand.u32 2147483647, %v704
    %vm844 = vcmp.eq.f32.partialorder %v843, 8.507059e+37
    %v845 = vand.u32 %v704, 2147483648
    %v846 = vor.u32 1.1754944e-38, %v845
    %v847 = vsel %vm844, %v846, %v842
    %v848 = vmul.f32 %v664, %v847
    %v849 = vrcp.pop %v707
    %v850 = vmul.f32 %v707, %v849
    %v851 = vsub.f32 1.0, %v850
    %v852 = vmul.f32 %v849, %v851
    %v853 = vadd.f32 %v849, %v852
    %vm854 = vweird.f32 %v707
    %vm855 = vweird.f32 %v849
    %vm856 = vmor %vm854, %vm855
    %v857 = vsel %vm856, %v849, %v853
    %v858 = vand.u32 2147483647, %v707
    %vm859 = vcmp.eq.f32.partialorder %v858, 8.507059e+37
    %v860 = vand.u32 %v707, 2147483648
    %v861 = vor.u32 1.1754944e-38, %v860
    %v862 = vsel %vm859, %v861, %v857
    %v863 = vmul.f32 %v666, %v862
    %v864 = vrcp.pop %v710
    %v865 = vmul.f32 %v710, %v864
    %v866 = vsub.f32 1.0, %v865
    %v867 = vmul.f32 %v864, %v866
    %v868 = vadd.f32 %v864, %v867
    %vm869 = vweird.f32 %v710
    %vm870 = vweird.f32 %v864
    %vm871 = vmor %vm869, %vm870
    %v872 = vsel %vm871, %v864, %v868
    %v873 = vand.u32 2147483647, %v710
    %vm874 = vcmp.eq.f32.partialorder %v873, 8.507059e+37
    %v875 = vand.u32 %v710, 2147483648
    %v876 = vor.u32 1.1754944e-38, %v875
    %v877 = vsel %vm874, %v876, %v872
    %v878 = vmul.f32 %v668, %v877
    %v879 = vrcp.pop %v713
    %v880 = vmul.f32 %v713, %v879
    %v881 = vsub.f32 1.0, %v880
    %v882 = vmul.f32 %v879, %v881
    %v883 = vadd.f32 %v879, %v882
    %vm884 = vweird.f32 %v713
    %vm885 = vweird.f32 %v879
    %vm886 = vmor %vm884, %vm885
    %v887 = vsel %vm886, %v879, %v883
    %v888 = vand.u32 2147483647, %v713
    %vm889 = vcmp.eq.f32.partialorder %v888, 8.507059e+37
    %v890 = vand.u32 %v713, 2147483648
    %v891 = vor.u32 1.1754944e-38, %v890
    %v892 = vsel %vm889, %v891, %v887
    %v893 = vmul.f32 %v670, %v892
    %v894 = vrcp.pop %v716
    %v895 = vmul.f32 %v716, %v894
    %v896 = vsub.f32 1.0, %v895
    %v897 = vmul.f32 %v894, %v896
    %v898 = vadd.f32 %v894, %v897
    %vm899 = vweird.f32 %v716
    %vm900 = vweird.f32 %v894
    %vm901 = vmor %vm899, %vm900
    %v902 = vsel %vm901, %v894, %v898
    %v903 = vand.u32 2147483647, %v716
    %vm904 = vcmp.eq.f32.partialorder %v903, 8.507059e+37
    %v905 = vand.u32 %v716, 2147483648
    %v906 = vor.u32 1.1754944e-38, %v905
    %v907 = vsel %vm904, %v906, %v902
    %v908 = vmul.f32 %v672, %v907
    %v909 = vrcp.pop %v719
    %v910 = vmul.f32 %v719, %v909
    %v911 = vsub.f32 1.0, %v910
    %v912 = vmul.f32 %v909, %v911
    %v913 = vadd.f32 %v909, %v912
    %vm914 = vweird.f32 %v719
    %vm915 = vweird.f32 %v909
    %vm916 = vmor %vm914, %vm915
    %v917 = vsel %vm916, %v909, %v913
    %v918 = vand.u32 2147483647, %v719
    %vm919 = vcmp.eq.f32.partialorder %v918, 8.507059e+37
    %v920 = vand.u32 %v719, 2147483648
    %v921 = vor.u32 1.1754944e-38, %v920
    %v922 = vsel %vm919, %v921, %v917
    %v923 = vmul.f32 %v674, %v922
    %v924 = vrcp.pop %v722
    %v925 = vmul.f32 %v722, %v924
    %v926 = vsub.f32 1.0, %v925
    %v927 = vmul.f32 %v924, %v926
    %v928 = vadd.f32 %v924, %v927
    %vm929 = vweird.f32 %v722
    %vm930 = vweird.f32 %v924
    %vm931 = vmor %vm929, %vm930
    %v932 = vsel %vm931, %v924, %v928
    %v933 = vand.u32 2147483647, %v722
    %vm934 = vcmp.eq.f32.partialorder %v933, 8.507059e+37
    %v935 = vand.u32 %v722, 2147483648
    %v936 = vor.u32 1.1754944e-38, %v935
    %v937 = vsel %vm934, %v936, %v932
    %v938 = vmul.f32 %v676, %v937
    %v939 = vrcp.pop %v725
    %v940 = vmul.f32 %v725, %v939
    %v941 = vsub.f32 1.0, %v940
    %v942 = vmul.f32 %v939, %v941
    %v943 = vadd.f32 %v939, %v942
    %vm944 = vweird.f32 %v725
    %vm945 = vweird.f32 %v939
    %vm946 = vmor %vm944, %vm945
    %v947 = vsel %vm946, %v939, %v943
    %v948 = vand.u32 2147483647, %v725
    %vm949 = vcmp.eq.f32.partialorder %v948, 8.507059e+37
    %v950 = vand.u32 %v725, 2147483648
    %v951 = vor.u32 1.1754944e-38, %v950
    %v952 = vsel %vm949, %v951, %v947
    %v953 = vmul.f32 %v678, %v952
    %v954 = vrcp.pop %v728
    %v955 = vmul.f32 %v728, %v954
    %v956 = vsub.f32 1.0, %v955
    %v957 = vmul.f32 %v954, %v956
    %v958 = vadd.f32 %v954, %v957
    %vm959 = vweird.f32 %v728
    %vm960 = vweird.f32 %v954
    %vm961 = vmor %vm959, %vm960
    %v962 = vsel %vm961, %v954, %v958
    %v963 = vand.u32 2147483647, %v728
    %vm964 = vcmp.eq.f32.partialorder %v963, 8.507059e+37
    %v965 = vand.u32 %v728, 2147483648
    %v966 = vor.u32 1.1754944e-38, %v965
    %v967 = vsel %vm964, %v966, %v962
    %v968 = vmul.f32 %v680, %v967
    %969 = vrot.lane.b32.xlu0 %v86, 64
    %v970 = vpop.permute.xlu0 %969
    %v973 = vsel %vm584, %v743, 0
    %975 = vmatpush.msra.mxu0 0.0
    %976 = vmatpush.msra.mxu0 0.0
    %977 = vmatpush.msra.mxu0 0.0
    %978 = vmatpush.msra.mxu0 0.0
    %979 = vmatpush.msra.mxu0 0.0
    %980 = vmatpush.msra.mxu0 0.0
    %981 = vmatpush.msra.mxu0 0.0
    %982 = vmatpush.msra.mxu0 0.0
    %983 = vmatpush.msra.mxu0 0.0
    %984 = vmatpush.msra.mxu0 0.0
    %985 = vmatpush.msra.mxu0 0.0
    %986 = vmatpush.msra.mxu0 0.0
    %987 = vmatpush.msra.mxu0 0.0
    %988 = vmatpush.msra.mxu0 0.0
    %989 = vmatpush.msra.mxu0 0.0
    %990 = vmatpush.msra.mxu0 %v970
    %991 = vmatmul.f32.gmra.mxu0 %v973
    %v992 = vpop.f32.mrf.mxu0
    %v993 = vadd.f32 0.0, %v992
    %994 = vdwg.mxu0
    %995 = vrot.lane.b32.xlu0 %v89, 64
    %v996 = vpop.permute.xlu0 %995
    %v999 = vsel %vm584, %v758, 0
    %1001 = vmatpush.msra.mxu0 0.0
    %1002 = vmatpush.msra.mxu0 0.0
    %1003 = vmatpush.msra.mxu0 0.0
    %1004 = vmatpush.msra.mxu0 0.0
    %1005 = vmatpush.msra.mxu0 0.0
    %1006 = vmatpush.msra.mxu0 0.0
    %1007 = vmatpush.msra.mxu0 0.0
    %1008 = vmatpush.msra.mxu0 0.0
    %1009 = vmatpush.msra.mxu0 0.0
    %1010 = vmatpush.msra.mxu0 0.0
    %1011 = vmatpush.msra.mxu0 0.0
    %1012 = vmatpush.msra.mxu0 0.0
    %1013 = vmatpush.msra.mxu0 0.0
    %1014 = vmatpush.msra.mxu0 0.0
    %1015 = vmatpush.msra.mxu0 0.0
    %1016 = vmatpush.msra.mxu0 %v996
    %1017 = vmatmul.f32.gmra.mxu0 %v999
    %v1018 = vpop.f32.mrf.mxu0
    %v1019 = vadd.f32 0.0, %v1018
    %1020 = vdwg.mxu0
    %1021 = vrot.lane.b32.xlu0 %v94, 64
    %v1022 = vpop.permute.xlu0 %1021
    %v1025 = vsel %vm584, %v773, 0
    %1027 = vmatpush.msra.mxu0 0.0
    %1028 = vmatpush.msra.mxu0 0.0
    %1029 = vmatpush.msra.mxu0 0.0
    %1030 = vmatpush.msra.mxu0 0.0
    %1031 = vmatpush.msra.mxu0 0.0
    %1032 = vmatpush.msra.mxu0 0.0
    %1033 = vmatpush.msra.mxu0 0.0
    %1034 = vmatpush.msra.mxu0 0.0
    %1035 = vmatpush.msra.mxu0 0.0
    %1036 = vmatpush.msra.mxu0 0.0
    %1037 = vmatpush.msra.mxu0 0.0
    %1038 = vmatpush.msra.mxu0 0.0
    %1039 = vmatpush.msra.mxu0 0.0
    %1040 = vmatpush.msra.mxu0 0.0
    %1041 = vmatpush.msra.mxu0 0.0
    %1042 = vmatpush.msra.mxu0 %v1022
    %1043 = vmatmul.f32.gmra.mxu0 %v1025
    %v1044 = vpop.f32.mrf.mxu0
    %v1045 = vadd.f32 0.0, %v1044
    %1046 = vdwg.mxu0
    %1047 = vrot.lane.b32.xlu0 %v96, 64
    %v1048 = vpop.permute.xlu0 %1047
    %v1051 = vsel %vm584, %v788, 0
    %1053 = vmatpush.msra.mxu0 0.0
    %1054 = vmatpush.msra.mxu0 0.0
    %1055 = vmatpush.msra.mxu0 0.0
    %1056 = vmatpush.msra.mxu0 0.0
    %1057 = vmatpush.msra.mxu0 0.0
    %1058 = vmatpush.msra.mxu0 0.0
    %1059 = vmatpush.msra.mxu0 0.0
    %1060 = vmatpush.msra.mxu0 0.0
    %1061 = vmatpush.msra.mxu0 0.0
    %1062 = vmatpush.msra.mxu0 0.0
    %1063 = vmatpush.msra.mxu0 0.0
    %1064 = vmatpush.msra.mxu0 0.0
    %1065 = vmatpush.msra.mxu0 0.0
    %1066 = vmatpush.msra.mxu0 0.0
    %1067 = vmatpush.msra.mxu0 0.0
    %1068 = vmatpush.msra.mxu0 %v1048
    %1069 = vmatmul.f32.gmra.mxu0 %v1051
    %v1070 = vpop.f32.mrf.mxu0
    %v1071 = vadd.f32 0.0, %v1070
    %1072 = vdwg.mxu0
    %1073 = vrot.lane.b32.xlu0 %v100, 64
    %v1074 = vpop.permute.xlu0 %1073
    %v1077 = vsel %vm584, %v803, 0
    %1079 = vmatpush.msra.mxu0 0.0
    %1080 = vmatpush.msra.mxu0 0.0
    %1081 = vmatpush.msra.mxu0 0.0
    %1082 = vmatpush.msra.mxu0 0.0
    %1083 = vmatpush.msra.mxu0 0.0
    %1084 = vmatpush.msra.mxu0 0.0
    %1085 = vmatpush.msra.mxu0 0.0
    %1086 = vmatpush.msra.mxu0 0.0
    %1087 = vmatpush.msra.mxu0 0.0
    %1088 = vmatpush.msra.mxu0 0.0
    %1089 = vmatpush.msra.mxu0 0.0
    %1090 = vmatpush.msra.mxu0 0.0
    %1091 = vmatpush.msra.mxu0 0.0
    %1092 = vmatpush.msra.mxu0 0.0
    %1093 = vmatpush.msra.mxu0 0.0
    %1094 = vmatpush.msra.mxu0 %v1074
    %1095 = vmatmul.f32.gmra.mxu0 %v1077
    %v1096 = vpop.f32.mrf.mxu0
    %v1097 = vadd.f32 0.0, %v1096
    %1098 = vdwg.mxu0
    %1099 = vrot.lane.b32.xlu0 %v102, 64
    %v1100 = vpop.permute.xlu0 %1099
    %v1103 = vsel %vm584, %v818, 0
    %1105 = vmatpush.msra.mxu0 0.0
    %1106 = vmatpush.msra.mxu0 0.0
    %1107 = vmatpush.msra.mxu0 0.0
    %1108 = vmatpush.msra.mxu0 0.0
    %1109 = vmatpush.msra.mxu0 0.0
    %1110 = vmatpush.msra.mxu0 0.0
    %1111 = vmatpush.msra.mxu0 0.0
    %1112 = vmatpush.msra.mxu0 0.0
    %1113 = vmatpush.msra.mxu0 0.0
    %1114 = vmatpush.msra.mxu0 0.0
    %1115 = vmatpush.msra.mxu0 0.0
    %1116 = vmatpush.msra.mxu0 0.0
    %1117 = vmatpush.msra.mxu0 0.0
    %1118 = vmatpush.msra.mxu0 0.0
    %1119 = vmatpush.msra.mxu0 0.0
    %1120 = vmatpush.msra.mxu0 %v1100
    %1121 = vmatmul.f32.gmra.mxu0 %v1103
    %v1122 = vpop.f32.mrf.mxu0
    %v1123 = vadd.f32 0.0, %v1122
    %1124 = vdwg.mxu0
    %1125 = vrot.lane.b32.xlu0 %v106, 64
    %v1126 = vpop.permute.xlu0 %1125
    %v1129 = vsel %vm584, %v833, 0
    %1131 = vmatpush.msra.mxu0 0.0
    %1132 = vmatpush.msra.mxu0 0.0
    %1133 = vmatpush.msra.mxu0 0.0
    %1134 = vmatpush.msra.mxu0 0.0
    %1135 = vmatpush.msra.mxu0 0.0
    %1136 = vmatpush.msra.mxu0 0.0
    %1137 = vmatpush.msra.mxu0 0.0
    %1138 = vmatpush.msra.mxu0 0.0
    %1139 = vmatpush.msra.mxu0 0.0
    %1140 = vmatpush.msra.mxu0 0.0
    %1141 = vmatpush.msra.mxu0 0.0
    %1142 = vmatpush.msra.mxu0 0.0
    %1143 = vmatpush.msra.mxu0 0.0
    %1144 = vmatpush.msra.mxu0 0.0
    %1145 = vmatpush.msra.mxu0 0.0
    %1146 = vmatpush.msra.mxu0 %v1126
    %1147 = vmatmul.f32.gmra.mxu0 %v1129
    %v1148 = vpop.f32.mrf.mxu0
    %v1149 = vadd.f32 0.0, %v1148
    %1150 = vdwg.mxu0
    %1151 = vrot.lane.b32.xlu0 %v108, 64
    %v1152 = vpop.permute.xlu0 %1151
    %v1155 = vsel %vm584, %v848, 0
    %1157 = vmatpush.msra.mxu0 0.0
    %1158 = vmatpush.msra.mxu0 0.0
    %1159 = vmatpush.msra.mxu0 0.0
    %1160 = vmatpush.msra.mxu0 0.0
    %1161 = vmatpush.msra.mxu0 0.0
    %1162 = vmatpush.msra.mxu0 0.0
    %1163 = vmatpush.msra.mxu0 0.0
    %1164 = vmatpush.msra.mxu0 0.0
    %1165 = vmatpush.msra.mxu0 0.0
    %1166 = vmatpush.msra.mxu0 0.0
    %1167 = vmatpush.msra.mxu0 0.0
    %1168 = vmatpush.msra.mxu0 0.0
    %1169 = vmatpush.msra.mxu0 0.0
    %1170 = vmatpush.msra.mxu0 0.0
    %1171 = vmatpush.msra.mxu0 0.0
    %1172 = vmatpush.msra.mxu0 %v1152
    %1173 = vmatmul.f32.gmra.mxu0 %v1155
    %v1174 = vpop.f32.mrf.mxu0
    %v1175 = vadd.f32 0.0, %v1174
    %1176 = vdwg.mxu0
    %1177 = vrot.lane.b32.xlu0 %v112, 64
    %v1178 = vpop.permute.xlu0 %1177
    %v1181 = vsel %vm584, %v863, 0
    %1183 = vmatpush.msra.mxu0 0.0
    %1184 = vmatpush.msra.mxu0 0.0
    %1185 = vmatpush.msra.mxu0 0.0
    %1186 = vmatpush.msra.mxu0 0.0
    %1187 = vmatpush.msra.mxu0 0.0
    %1188 = vmatpush.msra.mxu0 0.0
    %1189 = vmatpush.msra.mxu0 0.0
    %1190 = vmatpush.msra.mxu0 0.0
    %1191 = vmatpush.msra.mxu0 0.0
    %1192 = vmatpush.msra.mxu0 0.0
    %1193 = vmatpush.msra.mxu0 0.0
    %1194 = vmatpush.msra.mxu0 0.0
    %1195 = vmatpush.msra.mxu0 0.0
    %1196 = vmatpush.msra.mxu0 0.0
    %1197 = vmatpush.msra.mxu0 0.0
    %1198 = vmatpush.msra.mxu0 %v1178
    %1199 = vmatmul.f32.gmra.mxu0 %v1181
    %v1200 = vpop.f32.mrf.mxu0
    %v1201 = vadd.f32 0.0, %v1200
    %1202 = vdwg.mxu0
    %1203 = vrot.lane.b32.xlu0 %v114, 64
    %v1204 = vpop.permute.xlu0 %1203
    %v1207 = vsel %vm584, %v878, 0
    %1209 = vmatpush.msra.mxu0 0.0
    %1210 = vmatpush.msra.mxu0 0.0
    %1211 = vmatpush.msra.mxu0 0.0
    %1212 = vmatpush.msra.mxu0 0.0
    %1213 = vmatpush.msra.mxu0 0.0
    %1214 = vmatpush.msra.mxu0 0.0
    %1215 = vmatpush.msra.mxu0 0.0
    %1216 = vmatpush.msra.mxu0 0.0
    %1217 = vmatpush.msra.mxu0 0.0
    %1218 = vmatpush.msra.mxu0 0.0
    %1219 = vmatpush.msra.mxu0 0.0
    %1220 = vmatpush.msra.mxu0 0.0
    %1221 = vmatpush.msra.mxu0 0.0
    %1222 = vmatpush.msra.mxu0 0.0
    %1223 = vmatpush.msra.mxu0 0.0
    %1224 = vmatpush.msra.mxu0 %v1204
    %1225 = vmatmul.f32.gmra.mxu0 %v1207
    %v1226 = vpop.f32.mrf.mxu0
    %v1227 = vadd.f32 0.0, %v1226
    %1228 = vdwg.mxu0
    %1229 = vrot.lane.b32.xlu0 %v118, 64
    %v1230 = vpop.permute.xlu0 %1229
    %v1233 = vsel %vm584, %v893, 0
    %1235 = vmatpush.msra.mxu0 0.0
    %1236 = vmatpush.msra.mxu0 0.0
    %1237 = vmatpush.msra.mxu0 0.0
    %1238 = vmatpush.msra.mxu0 0.0
    %1239 = vmatpush.msra.mxu0 0.0
    %1240 = vmatpush.msra.mxu0 0.0
    %1241 = vmatpush.msra.mxu0 0.0
    %1242 = vmatpush.msra.mxu0 0.0
    %1243 = vmatpush.msra.mxu0 0.0
    %1244 = vmatpush.msra.mxu0 0.0
    %1245 = vmatpush.msra.mxu0 0.0
    %1246 = vmatpush.msra.mxu0 0.0
    %1247 = vmatpush.msra.mxu0 0.0
    %1248 = vmatpush.msra.mxu0 0.0
    %1249 = vmatpush.msra.mxu0 0.0
    %1250 = vmatpush.msra.mxu0 %v1230
    %1251 = vmatmul.f32.gmra.mxu0 %v1233
    %v1252 = vpop.f32.mrf.mxu0
    %v1253 = vadd.f32 0.0, %v1252
    %1254 = vdwg.mxu0
    %1255 = vrot.lane.b32.xlu0 %v120, 64
    %v1256 = vpop.permute.xlu0 %1255
    %v1259 = vsel %vm584, %v908, 0
    %1261 = vmatpush.msra.mxu0 0.0
    %1262 = vmatpush.msra.mxu0 0.0
    %1263 = vmatpush.msra.mxu0 0.0
    %1264 = vmatpush.msra.mxu0 0.0
    %1265 = vmatpush.msra.mxu0 0.0
    %1266 = vmatpush.msra.mxu0 0.0
    %1267 = vmatpush.msra.mxu0 0.0
    %1268 = vmatpush.msra.mxu0 0.0
    %1269 = vmatpush.msra.mxu0 0.0
    %1270 = vmatpush.msra.mxu0 0.0
    %1271 = vmatpush.msra.mxu0 0.0
    %1272 = vmatpush.msra.mxu0 0.0
    %1273 = vmatpush.msra.mxu0 0.0
    %1274 = vmatpush.msra.mxu0 0.0
    %1275 = vmatpush.msra.mxu0 0.0
    %1276 = vmatpush.msra.mxu0 %v1256
    %1277 = vmatmul.f32.gmra.mxu0 %v1259
    %v1278 = vpop.f32.mrf.mxu0
    %v1279 = vadd.f32 0.0, %v1278
    %1280 = vdwg.mxu0
    %1281 = vrot.lane.b32.xlu0 %v124, 64
    %v1282 = vpop.permute.xlu0 %1281
    %v1285 = vsel %vm584, %v923, 0
    %1287 = vmatpush.msra.mxu0 0.0
    %1288 = vmatpush.msra.mxu0 0.0
    %1289 = vmatpush.msra.mxu0 0.0
    %1290 = vmatpush.msra.mxu0 0.0
    %1291 = vmatpush.msra.mxu0 0.0
    %1292 = vmatpush.msra.mxu0 0.0
    %1293 = vmatpush.msra.mxu0 0.0
    %1294 = vmatpush.msra.mxu0 0.0
    %1295 = vmatpush.msra.mxu0 0.0
    %1296 = vmatpush.msra.mxu0 0.0
    %1297 = vmatpush.msra.mxu0 0.0
    %1298 = vmatpush.msra.mxu0 0.0
    %1299 = vmatpush.msra.mxu0 0.0
    %1300 = vmatpush.msra.mxu0 0.0
    %1301 = vmatpush.msra.mxu0 0.0
    %1302 = vmatpush.msra.mxu0 %v1282
    %1303 = vmatmul.f32.gmra.mxu0 %v1285
    %v1304 = vpop.f32.mrf.mxu0
    %v1305 = vadd.f32 0.0, %v1304
    %1306 = vdwg.mxu0
    %1307 = vrot.lane.b32.xlu0 %v126, 64
    %v1308 = vpop.permute.xlu0 %1307
    %v1311 = vsel %vm584, %v938, 0
    %1313 = vmatpush.msra.mxu0 0.0
    %1314 = vmatpush.msra.mxu0 0.0
    %1315 = vmatpush.msra.mxu0 0.0
    %1316 = vmatpush.msra.mxu0 0.0
    %1317 = vmatpush.msra.mxu0 0.0
    %1318 = vmatpush.msra.mxu0 0.0
    %1319 = vmatpush.msra.mxu0 0.0
    %1320 = vmatpush.msra.mxu0 0.0
    %1321 = vmatpush.msra.mxu0 0.0
    %1322 = vmatpush.msra.mxu0 0.0
    %1323 = vmatpush.msra.mxu0 0.0
    %1324 = vmatpush.msra.mxu0 0.0
    %1325 = vmatpush.msra.mxu0 0.0
    %1326 = vmatpush.msra.mxu0 0.0
    %1327 = vmatpush.msra.mxu0 0.0
    %1328 = vmatpush.msra.mxu0 %v1308
    %1329 = vmatmul.f32.gmra.mxu0 %v1311
    %v1330 = vpop.f32.mrf.mxu0
    %v1331 = vadd.f32 0.0, %v1330
    %1332 = vdwg.mxu0
    %1333 = vrot.lane.b32.xlu0 %v130, 64
    %v1334 = vpop.permute.xlu0 %1333
    %v1337 = vsel %vm584, %v953, 0
    %1339 = vmatpush.msra.mxu0 0.0
    %1340 = vmatpush.msra.mxu0 0.0
    %1341 = vmatpush.msra.mxu0 0.0
    %1342 = vmatpush.msra.mxu0 0.0
    %1343 = vmatpush.msra.mxu0 0.0
    %1344 = vmatpush.msra.mxu0 0.0
    %1345 = vmatpush.msra.mxu0 0.0
    %1346 = vmatpush.msra.mxu0 0.0
    %1347 = vmatpush.msra.mxu0 0.0
    %1348 = vmatpush.msra.mxu0 0.0
    %1349 = vmatpush.msra.mxu0 0.0
    %1350 = vmatpush.msra.mxu0 0.0
    %1351 = vmatpush.msra.mxu0 0.0
    %1352 = vmatpush.msra.mxu0 0.0
    %1353 = vmatpush.msra.mxu0 0.0
    %1354 = vmatpush.msra.mxu0 %v1334
    %1355 = vmatmul.f32.gmra.mxu0 %v1337
    %v1356 = vpop.f32.mrf.mxu0
    %v1357 = vadd.f32 0.0, %v1356
    %1358 = vdwg.mxu0
    %1359 = vrot.lane.b32.xlu0 %v132, 64
    %v1360 = vpop.permute.xlu0 %1359
    %v1363 = vsel %vm584, %v968, 0
    %1365 = vmatpush.msra.mxu0 0.0
    %1366 = vmatpush.msra.mxu0 0.0
    %1367 = vmatpush.msra.mxu0 0.0
    %1368 = vmatpush.msra.mxu0 0.0
    %1369 = vmatpush.msra.mxu0 0.0
    %1370 = vmatpush.msra.mxu0 0.0
    %1371 = vmatpush.msra.mxu0 0.0
    %1372 = vmatpush.msra.mxu0 0.0
    %1373 = vmatpush.msra.mxu0 0.0
    %1374 = vmatpush.msra.mxu0 0.0
    %1375 = vmatpush.msra.mxu0 0.0
    %1376 = vmatpush.msra.mxu0 0.0
    %1377 = vmatpush.msra.mxu0 0.0
    %1378 = vmatpush.msra.mxu0 0.0
    %1379 = vmatpush.msra.mxu0 0.0
    %1380 = vmatpush.msra.mxu0 %v1360
    %1381 = vmatmul.f32.gmra.mxu0 %v1363
    %v1382 = vpop.f32.mrf.mxu0
    %v1383 = vadd.f32 0.0, %v1382
    %1384 = vdwg.mxu0
    %1387 = vrot.lane.b32.xlu0 %v1045, 4
    %v1388 = vpop.permute.xlu0 %1387
    %1389 = vrot.lane.b32.xlu0 %v1071, 4
    %v1390 = vpop.permute.xlu0 %1389
    %1395 = vrot.lane.b32.xlu0 %v1097, 8
    %v1396 = vpop.permute.xlu0 %1395
    %1397 = vrot.lane.b32.xlu0 %v1123, 8
    %v1398 = vpop.permute.xlu0 %1397
    %1403 = vrot.lane.b32.xlu0 %v1149, 12
    %v1404 = vpop.permute.xlu0 %1403
    %1405 = vrot.lane.b32.xlu0 %v1175, 12
    %v1406 = vpop.permute.xlu0 %1405
    %1411 = vrot.lane.b32.xlu0 %v1201, 16
    %v1412 = vpop.permute.xlu0 %1411
    %1413 = vrot.lane.b32.xlu0 %v1227, 16
    %v1414 = vpop.permute.xlu0 %1413
    %1419 = vrot.lane.b32.xlu0 %v1253, 20
    %v1420 = vpop.permute.xlu0 %1419
    %1421 = vrot.lane.b32.xlu0 %v1279, 20
    %v1422 = vpop.permute.xlu0 %1421
    %1427 = vrot.lane.b32.xlu0 %v1305, 24
    %v1428 = vpop.permute.xlu0 %1427
    %1429 = vrot.lane.b32.xlu0 %v1331, 24
    %v1430 = vpop.permute.xlu0 %1429
    %1435 = vrot.lane.b32.xlu0 %v1357, 28
    %v1436 = vpop.permute.xlu0 %1435
    %1437 = vrot.lane.b32.xlu0 %v1383, 28
    %v1438 = vpop.permute.xlu0 %1437
    %v1441 = vsel %vm153, %v993, %v1388
    %v1442 = vsel %vm153, %v1019, %v1390
    %v1443 = vsel %vm584, %v1441, %v1396
    %v1444 = vsel %vm584, %v1442, %v1398
    %vm1445 = vcmask 97280
    %v1446 = vsel %vm1445, %v1443, %v1404
    %v1447 = vsel %vm1445, %v1444, %v1406
    %vm1448 = vcmask 130048
    %v1449 = vsel %vm1448, %v1446, %v1412
    %v1450 = vsel %vm1448, %v1447, %v1414
    %vm1451 = vcmask 162816
    %v1452 = vsel %vm1451, %v1449, %v1420
    %v1453 = vsel %vm1451, %v1450, %v1422
    %vm1454 = vcmask 195584
    %v1455 = vsel %vm1454, %v1452, %v1428
    %v1456 = vsel %vm1454, %v1453, %v1430
    %vm1457 = vcmask 228352
    %v1458 = vsel %vm1457, %v1455, %v1436
    %v1459 = vsel %vm1457, %v1456, %v1438
    %v1460 = vld [vmem:[%s4] sm:$0xff]
    %v1461 = vld [vmem:[%s4 + $0x8] sm:$0xff]
    %v1462 = vld [vmem:[%s4 + $0x10] sm:$0xff]
    %v1463 = vld [vmem:[%s4 + $0x18] sm:$0xff]
    %v1464 = vld [vmem:[%s5] sm:$0x1]
    %v1466 = vperm.slane %v1464, 0
    %v1469 = vsel %vm61, %v1458, 0
    %v1472 = vsel %vm61, %v1459, 0
    %1474 = vmatpush.msra.mxu0 0.0
    %1475 = vmatpush.msra.mxu0 0.0
    %1476 = vmatpush.msra.mxu0 0.0
    %1477 = vmatpush.msra.mxu0 0.0
    %1478 = vmatpush.msra.mxu0 0.0
    %1479 = vmatpush.msra.mxu0 0.0
    %1480 = vmatpush.msra.mxu0 0.0
    %1481 = vmatpush.msra.mxu0 0.0
    %1482 = vmatpush.msra.mxu0 0.0
    %1483 = vmatpush.msra.mxu0 0.0
    %1484 = vmatpush.msra.mxu0 0.0
    %1485 = vmatpush.msra.mxu0 0.0
    %1486 = vmatpush.msra.mxu0 %v1463
    %1487 = vmatpush.msra.mxu0 %v1462
    %1488 = vmatpush.msra.mxu0 %v1461
    %1489 = vmatpush.msra.mxu0 %v1460
    %1490 = vmatmul.f32.gmra.mxu0 %v1469
    %v1491 = vpop.f32.mrf.mxu0
    %v1492 = vadd.f32 %v1466, %v1491
    %1493 = vmatmul.f32.gmra.mxu0 %v1472
    %v1494 = vpop.f32.mrf.mxu0
    %v1495 = vadd.f32 %v1466, %v1494
    %1496 = vdwg.mxu0
    %v1497 = vadd.f32 %v51, %v1492
    %v1498 = vadd.f32 %v52, %v1495
    %v1499 = vld [vmem:[%s6] sm:$0x1]
    %v1500 = vld [vmem:[%s7] sm:$0x1]
    %v1501 = vsel %vm61, %v1497, 0.0
    %1502 = vadd.xlane.f32.xlu0 %v1501
    %v1503 = vpop.xlane.xlu0 %1502
    %v1504 = vsel %vm61, %v1498, 0.0
    %1505 = vadd.xlane.f32.xlu0 %v1504
    %v1506 = vpop.xlane.xlu0 %1505
    %v1507 = vrcp.pop 32.0
    %v1508 = vmul.f32 32.0, %v1507
    %v1509 = vsub.f32 1.0, %v1508
    %v1510 = vmul.f32 %v1507, %v1509
    %v1511 = vadd.f32 %v1507, %v1510
    %vm1512 = vweird.f32 %v1507
    %v1513 = vsel %vm1512, %v1507, %v1511
    %v1514 = vmul.f32 %v1503, %v1513
    %v1515 = vmul.f32 %v1506, %v1513
    %v1516 = vsub.f32 %v1497, %v1514
    %v1517 = vsub.f32 %v1498, %v1515
    %v1518 = vmul.f32 %v1516, %v1516
    %v1519 = vmul.f32 %v1517, %v1517
    %v1520 = vsel %vm61, %v1518, 0.0
    %1521 = vadd.xlane.f32.xlu0 %v1520
    %v1522 = vpop.xlane.xlu0 %1521
    %v1523 = vsel %vm61, %v1519, 0.0
    %1524 = vadd.xlane.f32.xlu0 %v1523
    %v1525 = vpop.xlane.xlu0 %1524
    %v1526 = vmul.f32 %v1522, %v1513
    %v1527 = vmul.f32 %v1525, %v1513
    %v1528 = vadd.f32 %v1526, 1e-05
    %v1529 = vadd.f32 %v1527, 1e-05
    %v1530 = vrsqrt.pop %v1528
    %v1531 = vmul.f32 %v1530, %v1528
    %v1532 = vmul.f32 %v1531, %v1530
    %v1533 = vmul.f32 0.5, %v1532
    %v1534 = vsub.f32 1.5, %v1533
    %v1535 = vmul.f32 %v1530, %v1534
    %vm1536 = vweird.f32 %v1528
    %vm1537 = vweird.f32 %v1530
    %vm1538 = vmor %vm1536, %vm1537
    %v1539 = vsel %vm1538, %v1530, %v1535
    %v1540 = vrsqrt.pop %v1529
    %v1541 = vmul.f32 %v1540, %v1529
    %v1542 = vmul.f32 %v1541, %v1540
    %v1543 = vmul.f32 0.5, %v1542
    %v1544 = vsub.f32 1.5, %v1543
    %v1545 = vmul.f32 %v1540, %v1544
    %vm1546 = vweird.f32 %v1529
    %vm1547 = vweird.f32 %v1540
    %vm1548 = vmor %vm1546, %vm1547
    %v1549 = vsel %vm1548, %v1540, %v1545
    %v1550 = vmul.f32 %v1516, %v1539
    %v1551 = vmul.f32 %v1517, %v1549
    %v1553 = vperm.slane %v1499, 0
    %v1555 = vmul.f32 %v1550, %v1553
    %v1556 = vmul.f32 %v1551, %v1553
    %v1558 = vperm.slane %v1500, 0
    %v1560 = vadd.f32 %v1555, %v1558
    %v1561 = vadd.f32 %v1556, %v1558
    %v1562 = vld [vmem:[%s8] sm:$0xff]
    %v1563 = vld [vmem:[%s8 + $0x8] sm:$0xff]
    %v1564 = vld [vmem:[%s8 + $0x10] sm:$0xff]
    %v1565 = vld [vmem:[%s8 + $0x18] sm:$0xff]
    %v1566 = vld [vmem:[%s9] sm:$0x1]
    %v1568 = vperm.slane %v1566, 0
    %v1571 = vsel %vm61, %v1560, 0
    %v1574 = vsel %vm61, %v1561, 0
    %1576 = vmatpush.msra.mxu0 0.0
    %1577 = vmatpush.msra.mxu0 0.0
    %1578 = vmatpush.msra.mxu0 0.0
    %1579 = vmatpush.msra.mxu0 0.0
    %1580 = vmatpush.msra.mxu0 0.0
    %1581 = vmatpush.msra.mxu0 0.0
    %1582 = vmatpush.msra.mxu0 0.0
    %1583 = vmatpush.msra.mxu0 0.0
    %1584 = vmatpush.msra.mxu0 0.0
    %1585 = vmatpush.msra.mxu0 0.0
    %1586 = vmatpush.msra.mxu0 0.0
    %1587 = vmatpush.msra.mxu0 0.0
    %1588 = vmatpush.msra.mxu0 %v1565
    %1589 = vmatpush.msra.mxu0 %v1564
    %1590 = vmatpush.msra.mxu0 %v1563
    %1591 = vmatpush.msra.mxu0 %v1562
    %1592 = vmatmul.f32.gmra.mxu0 %v1571
    %v1593 = vpop.f32.mrf.mxu0
    %v1594 = vadd.f32 %v1568, %v1593
    %1595 = vmatmul.f32.gmra.mxu0 %v1574
    %v1596 = vpop.f32.mrf.mxu0
    %v1597 = vadd.f32 %v1568, %v1596
    %1598 = vdwg.mxu0
    %v1599 = vmax.f32 %v1594, 0.0
    %v1600 = vmax.f32 %v1597, 0.0
    %v1601 = vld [vmem:[%s10] sm:$0xff]
    %v1602 = vld [vmem:[%s10 + $0x8] sm:$0xff]
    %v1603 = vld [vmem:[%s10 + $0x10] sm:$0xff]
    %v1604 = vld [vmem:[%s10 + $0x18] sm:$0xff]
    %v1605 = vld [vmem:[%s10 + $0x20] sm:$0xff]
    %v1606 = vld [vmem:[%s10 + $0x28] sm:$0xff]
    %v1607 = vld [vmem:[%s10 + $0x30] sm:$0xff]
    %v1608 = vld [vmem:[%s10 + $0x38] sm:$0xff]
    %v1609 = vld [vmem:[%s10 + $0x40] sm:$0xff]
    %v1610 = vld [vmem:[%s10 + $0x48] sm:$0xff]
    %v1611 = vld [vmem:[%s10 + $0x50] sm:$0xff]
    %v1612 = vld [vmem:[%s10 + $0x58] sm:$0xff]
    %v1613 = vld [vmem:[%s10 + $0x60] sm:$0xff]
    %v1614 = vld [vmem:[%s10 + $0x68] sm:$0xff]
    %v1615 = vld [vmem:[%s10 + $0x70] sm:$0xff]
    %v1616 = vld [vmem:[%s10 + $0x78] sm:$0xff]
    %v1617 = vld [vmem:[%s11] sm:$0x1]
    %v1619 = vperm.slane %v1617, 0
    %1621 = vmatpush.msra.mxu0 %v1616
    %1622 = vmatpush.msra.mxu0 %v1615
    %1623 = vmatpush.msra.mxu0 %v1614
    %1624 = vmatpush.msra.mxu0 %v1613
    %1625 = vmatpush.msra.mxu0 %v1612
    %1626 = vmatpush.msra.mxu0 %v1611
    %1627 = vmatpush.msra.mxu0 %v1610
    %1628 = vmatpush.msra.mxu0 %v1609
    %1629 = vmatpush.msra.mxu0 %v1608
    %1630 = vmatpush.msra.mxu0 %v1607
    %1631 = vmatpush.msra.mxu0 %v1606
    %1632 = vmatpush.msra.mxu0 %v1605
    %1633 = vmatpush.msra.mxu0 %v1604
    %1634 = vmatpush.msra.mxu0 %v1603
    %1635 = vmatpush.msra.mxu0 %v1602
    %1636 = vmatpush.msra.mxu0 %v1601
    %1637 = vmatmul.f32.gmra.mxu0 %v1599
    %v1638 = vpop.f32.mrf.mxu0
    %v1639 = vadd.f32 %v1619, %v1638
    %1640 = vmatmul.f32.gmra.mxu0 %v1600
    %v1641 = vpop.f32.mrf.mxu0
    %v1642 = vadd.f32 %v1619, %v1641
    %1643 = vdwg.mxu0
    %v1644 = vadd.f32 %v1560, %v1639
    %v1645 = vadd.f32 %v1561, %v1642
    %v1646 = vld [vmem:[%s12] sm:$0x1]
    %v1647 = vld [vmem:[%s13] sm:$0x1]
    %v1648 = vsel %vm61, %v1644, 0.0
    %1649 = vadd.xlane.f32.xlu0 %v1648
    %v1650 = vpop.xlane.xlu0 %1649
    %v1651 = vsel %vm61, %v1645, 0.0
    %1652 = vadd.xlane.f32.xlu0 %v1651
    %v1653 = vpop.xlane.xlu0 %1652
    %v1654 = vmul.f32 %v1650, %v1513
    %v1655 = vmul.f32 %v1653, %v1513
    %v1656 = vsub.f32 %v1644, %v1654
    %v1657 = vsub.f32 %v1645, %v1655
    %v1658 = vmul.f32 %v1656, %v1656
    %v1659 = vmul.f32 %v1657, %v1657
    %v1660 = vsel %vm61, %v1658, 0.0
    %1661 = vadd.xlane.f32.xlu0 %v1660
    %v1662 = vpop.xlane.xlu0 %1661
    %v1663 = vsel %vm61, %v1659, 0.0
    %1664 = vadd.xlane.f32.xlu0 %v1663
    %v1665 = vpop.xlane.xlu0 %1664
    %v1666 = vmul.f32 %v1662, %v1513
    %v1667 = vmul.f32 %v1665, %v1513
    %v1668 = vadd.f32 %v1666, 1e-05
    %v1669 = vadd.f32 %v1667, 1e-05
    %v1670 = vrsqrt.pop %v1668
    %v1671 = vmul.f32 %v1670, %v1668
    %v1672 = vmul.f32 %v1671, %v1670
    %v1673 = vmul.f32 0.5, %v1672
    %v1674 = vsub.f32 1.5, %v1673
    %v1675 = vmul.f32 %v1670, %v1674
    %vm1676 = vweird.f32 %v1668
    %vm1677 = vweird.f32 %v1670
    %vm1678 = vmor %vm1676, %vm1677
    %v1679 = vsel %vm1678, %v1670, %v1675
    %v1680 = vrsqrt.pop %v1669
    %v1681 = vmul.f32 %v1680, %v1669
    %v1682 = vmul.f32 %v1681, %v1680
    %v1683 = vmul.f32 0.5, %v1682
    %v1684 = vsub.f32 1.5, %v1683
    %v1685 = vmul.f32 %v1680, %v1684
    %vm1686 = vweird.f32 %v1669
    %vm1687 = vweird.f32 %v1680
    %vm1688 = vmor %vm1686, %vm1687
    %v1689 = vsel %vm1688, %v1680, %v1685
    %v1690 = vmul.f32 %v1656, %v1679
    %v1691 = vmul.f32 %v1657, %v1689
    %v1693 = vperm.slane %v1646, 0
    %v1695 = vmul.f32 %v1690, %v1693
    %v1696 = vmul.f32 %v1691, %v1693
    %v1698 = vperm.slane %v1647, 0
    %v1700 = vadd.f32 %v1695, %v1698
    %v1701 = vadd.f32 %v1696, %v1698
    %1702 = vst.msk [vmem:[#allocation2] sm:$0xff] %vm61, %v1700
    %1703 = vst.msk [vmem:[#allocation2 + $0x8] sm:$0xff] %vm61, %v1701
    // Predicated region
    $region58: #{tpu_custom_call.1} parent=1 // pred_check
      _
    $region59: #{tpu_custom_call.1} parent=1 // pred_check_branch
      %1705 = sbr.rel (0) target = $region61
    $region60: #{tpu_custom_call.1} parent=1 // pred_region
      %1707 = vsyncadd [#allocation3], 0
      %s1708 = sshll.u32 [#allocation2], 4
      %s1709 = int_to_ptr.vmem [resolvable:$true] %s1708
      %s1710 = sshll.u32 %s14, 4
      %s1711 = int_to_ptr.hbm [resolvable:$true] %s1710
      %1716 = dma.vmem_to_hbm [thread:$0]  %s1709, 256, %s1711, [#allocation3], 128, 128, 8
    $region61: #{tpu_custom_call.1} parent=1 // pred_fallthru
      _
    // Predicated region
    $region62: #{tpu_custom_call.1} parent=1 // pred_check
      _
    $region63: #{tpu_custom_call.1} parent=1 // pred_check_branch
      %1718 = sbr.rel (0) target = $region65
    $region64: #{tpu_custom_call.1} parent=1 // pred_region
      %1720 = dma.done [#allocation3], 256
    $region65: #{tpu_custom_call.1} parent=1 // pred_fallthru
      _
    %1721 = vsyncpa [#allocation3], 1

</llo_original>
